<compile_context>
chip_gen: v7x
topology: tpu7x:2x2x1
jax: 0.10.0
libtpu: 0.0.40
codegen_flags: <defaults>
</compile_context>

<pallas_src>
import math
from functools import partial

import jax
import jax.numpy as jnp
from jax import lax
from jax.experimental import pallas as pl
from jax.experimental.pallas import tpu as pltpu


# ---------------------------------------------------------------------------
# Per-generation VMEM budget
# ---------------------------------------------------------------------------

_VMEM_LIMIT_CACHE = None


def _vmem_limit_bytes():
    """~75% of physical VMEM, capped at 100 MiB (=> ~96 MiB on v5e/v6e, 48 MiB on v7x)."""
    global _VMEM_LIMIT_CACHE
    if _VMEM_LIMIT_CACHE is None:
        try:
            cap = int(pltpu.get_tpu_info().vmem_capacity_bytes)
            if cap <= 0:
                cap = 64 * 1024 * 1024
        except Exception:
            cap = 64 * 1024 * 1024          # conservative v7x per-core default
        _VMEM_LIMIT_CACHE = max(32 * 1024 * 1024,
                                min(cap * 3 // 4, 100 * 1024 * 1024))
    return _VMEM_LIMIT_CACHE


# ---------------------------------------------------------------------------
# VMEM-aware tile pickers
# ---------------------------------------------------------------------------

def _candidates(dim, prefs):
    cs = [c for c in prefs if dim % c == 0]
    return cs if cs else [dim]


def _linear_tiles(M, N, K, budget):
    """Largest (tm, tn, tk) whose double-buffered bf16 blocks + f32 acc fit the budget."""
    tms = _candidates(M, (1024, 512, 256, 128))
    tns = _candidates(N, (512, 256, 128))
    tks = _candidates(K, (512, 256, 128))
    for tm in tms:
        for tn in tns:
            for tk in tks:
                fp = (4 * (tm * tk + tk * tn + tm * tn)   # bf16 x/w/out, 2 bufs
                      + 8 * tn                            # f32 bias, 2 bufs
                      + 4 * tm * tn)                       # f32 accumulator
                if fp <= budget:
                    return tm, tn, tk
    return tms[-1], tns[-1], tks[-1]


def _attn_tiles(T, gd, g, head_dim, budget):
    """Largest (tq, tkv) (prefer big tq; halves K/V re-reads) fitting the budget."""
    tqs = _candidates(T, (512, 256, 128))
    tkvs = _candidates(T, (512, 256, 128))
    for tq in tqs:
        for tkv in tkvs:
            fp = (4 * (2 * tq * gd + 2 * tkv * gd)        # bf16 q/o + k/v, 2 bufs
                  + 4 * (g * tq * head_dim + 2 * g * tq))  # f32 acc + m/l scratch
            if fp <= budget:
                return tq, tkv
    return tqs[-1], tkvs[-1]


def _head_group(n_head, head_dim):
    """Smallest divisor g of n_head with (g*head_dim) % 128 == 0; fall back to all heads."""
    for g in range(1, n_head + 1):
        if n_head % g == 0 and (g * head_dim) % 128 == 0:
            return g
    return n_head          # block spans the full C lane range (always legal)


# ---------------------------------------------------------------------------
# Tiled linear:  out[s] = x @ w[s] + b[s]      (s = segment axis: q/k/v or 1)
# ---------------------------------------------------------------------------

def _linear_kernel(x_ref, w_ref, b_ref, o_ref, acc_ref):
    # grid = (M//tm, N//tn, S, K//tk); K (axis 3) is the innermost reduction.
    @pl.when(pl.program_id(3) == 0)
    def _init():
        acc_ref[...] = jnp.zeros_like(acc_ref)

    # bf16 x bf16 -> f32 accumulation on the MXU.
    acc_ref[...] += jnp.dot(x_ref[...], w_ref[...],
                            preferred_element_type=jnp.float32)

    @pl.when(pl.program_id(3) == pl.num_programs(3) - 1)
    def _finalize():
        # Bias (f32) added exactly once, at the final K step.
        o_ref[...] = (acc_ref[...] + b_ref[...]).astype(o_ref.dtype)


def fused_linear(x2d, w3, b3, out_dtype):
    """x2d: (M, K) bf16; w3: (S, K, N) bf16; b3: (S, 1, N) f32  ->  (S, M, N) out_dtype."""
    M, K = x2d.shape
    S, _, N = w3.shape
    vmem_limit = _vmem_limit_bytes()
    tm, tn, tk = _linear_tiles(M, N, K, int(0.8 * vmem_limit))
    # M/N lead the grid so the v7x megacore split never lands on the size-S axis.
    grid = (M // tm, N // tn, S, K // tk)
    return pl.pallas_call(
        _linear_kernel,
        out_shape=jax.ShapeDtypeStruct((S, M, N), out_dtype),
        grid=grid,
        in_specs=[
            pl.BlockSpec((tm, tk), lambda i, j, s, k: (i, k)),
            pl.BlockSpec((None, tk, tn), lambda i, j, s, k: (s, k, j)),
            pl.BlockSpec((None, 1, tn), lambda i, j, s, k: (s, 0, j)),
        ],
        out_specs=pl.BlockSpec((None, tm, tn), lambda i, j, s, k: (s, i, j)),
        scratch_shapes=[pltpu.VMEM((tm, tn), jnp.float32)],
        compiler_params=pltpu.CompilerParams(
            dimension_semantics=("parallel", "parallel", "parallel", "arbitrary"),
            vmem_limit_bytes=vmem_limit,
        ),
    )(x2d, w3, b3)


# ---------------------------------------------------------------------------
# Flash-style non-causal multi-head attention (head groups on the grid)
# ---------------------------------------------------------------------------

def _make_attention_kernel(g, head_dim):
    def kernel(q_ref, k_ref, v_ref, o_ref, m_sc, l_sc, acc_sc):
        # q_ref: (tq, g*hd) bf16, k/v_ref: (tkv, g*hd) bf16, o_ref: (tq, g*hd) bf16
        # m_sc/l_sc: (g, tq, 1) f32, acc_sc: (g, tq, hd) f32 (leading head axis).
        ki = pl.program_id(3)

        @pl.when(ki == 0)
        def _init():
            m_sc[...] = jnp.full_like(m_sc, -jnp.inf)
            l_sc[...] = jnp.zeros_like(l_sc)
            acc_sc[...] = jnp.zeros_like(acc_sc)

        # Only the g heads of this grid block are unrolled (g is 1-2 typically;
        # remaining heads live on grid axis 1), so vreg pressure stays bounded.
        for j in range(g):
            lo = j * head_dim
            q = q_ref[:, lo:lo + head_dim]          # 1/sqrt(hd) pre-folded into W_q
            k = k_ref[:, lo:lo + head_dim]
            v = v_ref[:, lo:lo + head_dim]
            # q @ k^T (bf16 operands, f32 result) without materializing k.T.
            s = lax.dot_general(q, k, (((1,), (1,)), ((), ())),
                                preferred_element_type=jnp.float32)   # (tq, tkv)
            m_prev = m_sc[j]                                          # (tq, 1)
            m_new = jnp.maximum(m_prev, jnp.max(s, axis=-1, keepdims=True))
            alpha = jnp.exp(m_prev - m_new)
            p = jnp.exp(s - m_new)
            l_sc[j] = alpha * l_sc[j] + jnp.sum(p, axis=-1, keepdims=True)
            acc_sc[j] = alpha * acc_sc[j] + jnp.dot(
                p.astype(v.dtype), v, preferred_element_type=jnp.float32)
            m_sc[j] = m_new

        @pl.when(ki == pl.num_programs(3) - 1)
        def _finalize():
            # Exact division (off the hot path), lane-offset stores only here.
            for j in range(g):
                lo = j * head_dim
                o_ref[:, lo:lo + head_dim] = (
                    acc_sc[j] / l_sc[j]).astype(o_ref.dtype)

    return kernel


def flash_attention(qkv, n_head):
    """qkv: (3, B, T, C) bf16 -> (B, T, C) bf16; non-causal, KV-streamed softmax."""
    _, B, T, C = qkv.shape
    head_dim = C // n_head
    g = _head_group(n_head, head_dim)     # heads per block (lane width g*hd)
    gd = g * head_dim
    nhg = n_head // g
    vmem_limit = _vmem_limit_bytes()
    tq, tkv = _attn_tiles(T, gd, g, head_dim, int(0.8 * vmem_limit))
    grid = (B, nhg, T // tq, T // tkv)
    kernel = _make_attention_kernel(g, head_dim)
    return pl.pallas_call(
        kernel,
        out_shape=jax.ShapeDtypeStruct((B, T, C), jnp.bfloat16),
        grid=grid,
        in_specs=[
            pl.BlockSpec((None, None, tq, gd),
                         lambda b, hg, qi, ki: (0, b, qi, hg)),
            pl.BlockSpec((None, None, tkv, gd),
                         lambda b, hg, qi, ki: (1, b, ki, hg)),
            pl.BlockSpec((None, None, tkv, gd),
                         lambda b, hg, qi, ki: (2, b, ki, hg)),
        ],
        out_specs=pl.BlockSpec((None, tq, gd),
                               lambda b, hg, qi, ki: (b, qi, hg)),
        scratch_shapes=[
            pltpu.VMEM((g, tq, 1), jnp.float32),         # running max m
            pltpu.VMEM((g, tq, 1), jnp.float32),         # running sum l
            pltpu.VMEM((g, tq, head_dim), jnp.float32),  # output accumulator
        ],
        compiler_params=pltpu.CompilerParams(
            dimension_semantics=("parallel", "parallel", "parallel", "arbitrary"),
            vmem_limit_bytes=vmem_limit,
        ),
    )(qkv, qkv, qkv)


# ---------------------------------------------------------------------------
# Forward pass (eval mode)
# ---------------------------------------------------------------------------

@partial(jax.jit, static_argnames=("n_head",))
def non_causal_self_attention(x, params, n_head):
    B, T, C = x.shape
    head_dim = C // n_head
    scale = 1.0 / math.sqrt(head_dim)

    x2d = x.reshape(B * T, C).astype(jnp.bfloat16)

    # c_attn: (C, 3C) weight, columns ordered [q | k | v]. Rearranged once to
    # (3, C, C); the softmax scale is folded into the q segment here (free).
    seg_scale = jnp.array([scale, 1.0, 1.0], jnp.float32)
    w_qkv = (params["w_attn"].reshape(C, 3, C).transpose(1, 0, 2)
             * seg_scale[:, None, None]).astype(jnp.bfloat16)       # (3, C, C)
    b_qkv = params["b_attn"].reshape(3, 1, C) * seg_scale[:, None, None]

    qkv = fused_linear(x2d, w_qkv, b_qkv, out_dtype=jnp.bfloat16)   # (3, B*T, C)
    qkv = qkv.reshape(3, B, T, C)                                    # free reshape

    # Attention; output already in (B, T, C) layout (no inverse head transpose).
    y = flash_attention(qkv, n_head)                                 # bf16

    # c_proj (final output back in f32).
    w_p = params["w_proj"].astype(jnp.bfloat16).reshape(1, C, C)
    b_p = params["b_proj"].reshape(1, 1, C).astype(jnp.float32)
    out = fused_linear(y.reshape(B * T, C), w_p, b_p, out_dtype=jnp.float32)

    # attn_dropout / resid_dropout are identity in eval mode.
    return out.reshape(B, T, C)


# ---------------------------------------------------------------------------
# Reference (pure f32 JAX) for sanity checking
# ---------------------------------------------------------------------------

def reference(x, params, n_head):
    B, T, C = x.shape
    hd = C // n_head
    qkv = x.reshape(B * T, C) @ params["w_attn"] + params["b_attn"]
    q, k, v = jnp.split(qkv, 3, axis=-1)

    def heads(t):
        return t.reshape(B, T, n_head, hd).transpose(0, 2, 1, 3)

    q, k, v = heads(q), heads(k), heads(v)
    att = jnp.einsum("bhqd,bhkd->bhqk", q, k) / math.sqrt(hd)
    att = jax.nn.softmax(att, axis=-1)
    y = jnp.einsum("bhqk,bhkd->bhqd", att, v)
    y = y.transpose(0, 2, 1, 3).reshape(B * T, C)
    y = y @ params["w_proj"] + params["b_proj"]
    return y.reshape(B, T, C)


# ---------------------------------------------------------------------------
# Main
# ---------------------------------------------------------------------------

if __name__ == "__main__":
    # Small config consistent with the module: C % n_head == 0.
    B, T, C, n_head = 2, 8, 32, 4

    key = jax.random.PRNGKey(0)
    k_x, k_wa, k_ba, k_wp, k_bp = jax.random.split(key, 5)

    x = jax.random.normal(k_x, (B, T, C), dtype=jnp.float32)

    # PyTorch Linear stores (out, in); we keep (in, out) so kernels do x @ W.
    bound = 1.0 / math.sqrt(C)
    params = {
        "w_attn": jax.random.uniform(k_wa, (C, 3 * C), jnp.float32, -bound, bound),
        "b_attn": jax.random.uniform(k_ba, (3 * C,), jnp.float32, -bound, bound),
        "w_proj": jax.random.uniform(k_wp, (C, C), jnp.float32, -bound, bound),
        "b_proj": jax.random.uniform(k_bp, (C,), jnp.float32, -bound, bound),
    }

    out = non_causal_self_attention(x, params, n_head=n_head)
    out = jax.block_until_ready(out)

    ref = reference(x, params, n_head)
    assert out.shape == (B, T, C)
    # Tolerance accounts for bf16 MXU operands / bf16 HBM intermediates
    # (per the perf review) compared against a pure-f32 reference.
    err = float(jnp.max(jnp.abs(out - ref)))
    assert jnp.allclose(out, ref, atol=3e-2, rtol=3e-2), \
        f"mismatch vs reference (max abs err {err:.4e})"

    print("KERNEL_OK")
</pallas_src>

<mosaic_0001>
module attributes {stable_mosaic.version = 11 : i64} {
  func.func @_linear_kernel(%arg0: i32, %arg1: i32, %arg2: i32, %arg3: i32, %arg4: memref<16x32xbf16, #tpu.memory_space<vmem>>, %arg5: memref<1x32x32xbf16, #tpu.memory_space<vmem>>, %arg6: memref<1x1x32xf32, #tpu.memory_space<vmem>>, %arg7: memref<1x16x32xf32, #tpu.memory_space<vmem>>, %arg8: memref<16x32xf32, #tpu.memory_space<vmem>>) attributes {dimension_semantics = [#tpu.dimension_semantics<parallel>, #tpu.dimension_semantics<parallel>, #tpu.dimension_semantics<parallel>, #tpu.dimension_semantics<arbitrary>], iteration_bounds = array<i64: 1, 1, 1, 1>, scalar_prefetch = 0 : i64, scratch_operands = 1 : i64, tpu.core_type = #tpu.core_type<tc>, window_params = [{transform_indices = @transform_0, window_bounds = array<i64: 16, 32>}, {transform_indices = @transform_1, window_bounds = array<i64: 1, 32, 32>}, {transform_indices = @transform_2, window_bounds = array<i64: 1, 1, 32>}, {transform_indices = @transform_3, window_bounds = array<i64: 1, 16, 32>}]} {
    %c0_i32 = arith.constant 0 : i32
    %0 = arith.cmpi eq, %arg3, %c0_i32 : i32
    %1 = arith.extui %0 : i1 to i32
    %c0_i32_0 = arith.constant 0 : i32
    %2 = arith.cmpi ne, %1, %c0_i32_0 : i32
    scf.if %2 {
      %cst_11 = arith.constant 0.000000e+00 : f32
      %13 = vector.broadcast %cst_11 : f32 to vector<16x32xf32>
      %c0_12 = arith.constant 0 : index
      %c0_13 = arith.constant 0 : index
      %14 = vector.load %arg8[%c0_12, %c0_13] : memref<16x32xf32, #tpu.memory_space<vmem>>, vector<16x32xf32>
      tpu.vector_store %arg8[%c0_12, %c0_13], %13 {strides = array<i32>} : memref<16x32xf32, #tpu.memory_space<vmem>>, vector<16x32xf32>,
    } else {
    }
    %c0 = arith.constant 0 : index
    %c0_1 = arith.constant 0 : index
    %3 = vector.load %arg8[%c0, %c0_1] : memref<16x32xf32, #tpu.memory_space<vmem>>, vector<16x32xf32>
    %c0_2 = arith.constant 0 : index
    %c0_3 = arith.constant 0 : index
    %4 = vector.load %arg4[%c0_2, %c0_3] : memref<16x32xbf16, #tpu.memory_space<vmem>>, vector<16x32xbf16>
    %c0_4 = arith.constant 0 : index
    %c0_5 = arith.constant 0 : index
    %c0_6 = arith.constant 0 : index
    %5 = vector.load %arg5[%c0_4, %c0_5, %c0_6] : memref<1x32x32xbf16, #tpu.memory_space<vmem>>, vector<1x32x32xbf16>
    %6 = vector.shape_cast %5 : vector<1x32x32xbf16> to vector<32x32xbf16>
    %cst = arith.constant dense<0.000000e+00> : vector<16x32xf32>
    %7 = tpu.matmul %4, %6, %cst {dimension_numbers = #tpu.dot_dimension_numbers<[1], [0], [0], [1], [0, 0, 1, 1], [], []>} : vector<16x32xbf16>, vector<32x32xbf16>, vector<16x32xf32> -> vector<16x32xf32>
    %8 = arith.addf %3, %7 : vector<16x32xf32>
    %c0_7 = arith.constant 0 : index
    %c0_8 = arith.constant 0 : index
    %9 = vector.load %arg8[%c0_7, %c0_8] : memref<16x32xf32, #tpu.memory_space<vmem>>, vector<16x32xf32>
    tpu.vector_store %arg8[%c0_7, %c0_8], %8 {strides = array<i32>} : memref<16x32xf32, #tpu.memory_space<vmem>>, vector<16x32xf32>,
    %c0_i32_9 = arith.constant 0 : i32
    %10 = arith.cmpi eq, %arg3, %c0_i32_9 : i32
    %11 = arith.extui %10 : i1 to i32
    %c0_i32_10 = arith.constant 0 : i32
    %12 = arith.cmpi ne, %11, %c0_i32_10 : i32
    scf.if %12 {
      %c0_11 = arith.constant 0 : index
      %c0_12 = arith.constant 0 : index
      %13 = vector.load %arg8[%c0_11, %c0_12] : memref<16x32xf32, #tpu.memory_space<vmem>>, vector<16x32xf32>
      %c0_13 = arith.constant 0 : index
      %c0_14 = arith.constant 0 : index
      %c0_15 = arith.constant 0 : index
      %14 = vector.load %arg6[%c0_13, %c0_14, %c0_15] : memref<1x1x32xf32, #tpu.memory_space<vmem>>, vector<1x1x32xf32>
      %15 = vector.shape_cast %14 : vector<1x1x32xf32> to vector<1x32xf32>
      %16 = vector.broadcast %15 : vector<1x32xf32> to vector<16x32xf32>
      %17 = arith.addf %13, %16 : vector<16x32xf32>
      %c0_16 = arith.constant 0 : index
      %c0_17 = arith.constant 0 : index
      %c0_18 = arith.constant 0 : index
      %18 = vector.load %arg7[%c0_16, %c0_17, %c0_18] : memref<1x16x32xf32, #tpu.memory_space<vmem>>, vector<1x16x32xf32>
      %19 = vector.shape_cast %18 : vector<1x16x32xf32> to vector<16x32xf32>
      %20 = vector.shape_cast %17 : vector<16x32xf32> to vector<1x16x32xf32>
      tpu.vector_store %arg7[%c0_16, %c0_17, %c0_18], %20 {strides = array<i32>} : memref<1x16x32xf32, #tpu.memory_space<vmem>>, vector<1x16x32xf32>,
    } else {
    }
    return
  }
  func.func @transform_0(%arg0: i32, %arg1: i32, %arg2: i32, %arg3: i32) -> (i32, i32) {
    %c0_i32 = arith.constant 0 : i32
    return %arg0, %arg3 : i32, i32
  }
  func.func @transform_1(%arg0: i32, %arg1: i32, %arg2: i32, %arg3: i32) -> (i32, i32, i32) {
    %c0_i32 = arith.constant 0 : i32
    return %arg2, %arg3, %arg1 : i32, i32, i32
  }
  func.func @transform_2(%arg0: i32, %arg1: i32, %arg2: i32, %arg3: i32) -> (i32, i32, i32) {
    %c0_i32 = arith.constant 0 : i32
    %c0_i32_0 = arith.constant 0 : i32
    return %arg2, %c0_i32, %arg1 : i32, i32, i32
  }
  func.func @transform_3(%arg0: i32, %arg1: i32, %arg2: i32, %arg3: i32) -> (i32, i32, i32) {
    %c0_i32 = arith.constant 0 : i32
    return %arg2, %arg0, %arg1 : i32, i32, i32
  }
}

module attributes {stable_mosaic.version = 11 : i64} {
  func.func @_linear_kernel(%arg0: i32, %arg1: i32, %arg2: i32, %arg3: i32, %arg4: memref<16x32xbf16, #tpu.memory_space<vmem>>, %arg5: memref<1x32x32xbf16, #tpu.memory_space<vmem>>, %arg6: memref<1x1x32xf32, #tpu.memory_space<vmem>>, %arg7: memref<1x16x32xbf16, #tpu.memory_space<vmem>>, %arg8: memref<16x32xf32, #tpu.memory_space<vmem>>) attributes {dimension_semantics = [#tpu.dimension_semantics<parallel>, #tpu.dimension_semantics<parallel>, #tpu.dimension_semantics<parallel>, #tpu.dimension_semantics<arbitrary>], iteration_bounds = array<i64: 1, 1, 3, 1>, scalar_prefetch = 0 : i64, scratch_operands = 1 : i64, tpu.core_type = #tpu.core_type<tc>, window_params = [{transform_indices = @transform_0, window_bounds = array<i64: 16, 32>}, {transform_indices = @transform_1, window_bounds = array<i64: 1, 32, 32>}, {transform_indices = @transform_2, window_bounds = array<i64: 1, 1, 32>}, {transform_indices = @transform_3, window_bounds = array<i64: 1, 16, 32>}]} {
    %c0_i32 = arith.constant 0 : i32
    %0 = arith.cmpi eq, %arg3, %c0_i32 : i32
    %1 = arith.extui %0 : i1 to i32
    %c0_i32_0 = arith.constant 0 : i32
    %2 = arith.cmpi ne, %1, %c0_i32_0 : i32
    scf.if %2 {
      %cst_11 = arith.constant 0.000000e+00 : f32
      %13 = vector.broadcast %cst_11 : f32 to vector<16x32xf32>
      %c0_12 = arith.constant 0 : index
      %c0_13 = arith.constant 0 : index
      %14 = vector.load %arg8[%c0_12, %c0_13] : memref<16x32xf32, #tpu.memory_space<vmem>>, vector<16x32xf32>
      tpu.vector_store %arg8[%c0_12, %c0_13], %13 {strides = array<i32>} : memref<16x32xf32, #tpu.memory_space<vmem>>, vector<16x32xf32>,
    } else {
    }
    %c0 = arith.constant 0 : index
    %c0_1 = arith.constant 0 : index
    %3 = vector.load %arg8[%c0, %c0_1] : memref<16x32xf32, #tpu.memory_space<vmem>>, vector<16x32xf32>
    %c0_2 = arith.constant 0 : index
    %c0_3 = arith.constant 0 : index
    %4 = vector.load %arg4[%c0_2, %c0_3] : memref<16x32xbf16, #tpu.memory_space<vmem>>, vector<16x32xbf16>
    %c0_4 = arith.constant 0 : index
    %c0_5 = arith.constant 0 : index
    %c0_6 = arith.constant 0 : index
    %5 = vector.load %arg5[%c0_4, %c0_5, %c0_6] : memref<1x32x32xbf16, #tpu.memory_space<vmem>>, vector<1x32x32xbf16>
    %6 = vector.shape_cast %5 : vector<1x32x32xbf16> to vector<32x32xbf16>
    %cst = arith.constant dense<0.000000e+00> : vector<16x32xf32>
    %7 = tpu.matmul %4, %6, %cst {dimension_numbers = #tpu.dot_dimension_numbers<[1], [0], [0], [1], [0, 0, 1, 1], [], []>} : vector<16x32xbf16>, vector<32x32xbf16>, vector<16x32xf32> -> vector<16x32xf32>
    %8 = arith.addf %3, %7 : vector<16x32xf32>
    %c0_7 = arith.constant 0 : index
    %c0_8 = arith.constant 0 : index
    %9 = vector.load %arg8[%c0_7, %c0_8] : memref<16x32xf32, #tpu.memory_space<vmem>>, vector<16x32xf32>
    tpu.vector_store %arg8[%c0_7, %c0_8], %8 {strides = array<i32>} : memref<16x32xf32, #tpu.memory_space<vmem>>, vector<16x32xf32>,
    %c0_i32_9 = arith.constant 0 : i32
    %10 = arith.cmpi eq, %arg3, %c0_i32_9 : i32
    %11 = arith.extui %10 : i1 to i32
    %c0_i32_10 = arith.constant 0 : i32
    %12 = arith.cmpi ne, %11, %c0_i32_10 : i32
    scf.if %12 {
      %c0_11 = arith.constant 0 : index
      %c0_12 = arith.constant 0 : index
      %13 = vector.load %arg8[%c0_11, %c0_12] : memref<16x32xf32, #tpu.memory_space<vmem>>, vector<16x32xf32>
      %c0_13 = arith.constant 0 : index
      %c0_14 = arith.constant 0 : index
      %c0_15 = arith.constant 0 : index
      %14 = vector.load %arg6[%c0_13, %c0_14, %c0_15] : memref<1x1x32xf32, #tpu.memory_space<vmem>>, vector<1x1x32xf32>
      %15 = vector.shape_cast %14 : vector<1x1x32xf32> to vector<1x32xf32>
      %16 = vector.broadcast %15 : vector<1x32xf32> to vector<16x32xf32>
      %17 = arith.addf %13, %16 : vector<16x32xf32>
      %18 = arith.truncf %17 : vector<16x32xf32> to vector<16x32xbf16>
      %c0_16 = arith.constant 0 : index
      %c0_17 = arith.constant 0 : index
      %c0_18 = arith.constant 0 : index
      %19 = vector.load %arg7[%c0_16, %c0_17, %c0_18] : memref<1x16x32xbf16, #tpu.memory_space<vmem>>, vector<1x16x32xbf16>
      %20 = vector.shape_cast %19 : vector<1x16x32xbf16> to vector<16x32xbf16>
      %21 = vector.shape_cast %18 : vector<16x32xbf16> to vector<1x16x32xbf16>
      tpu.vector_store %arg7[%c0_16, %c0_17, %c0_18], %21 {strides = array<i32>} : memref<1x16x32xbf16, #tpu.memory_space<vmem>>, vector<1x16x32xbf16>,
    } else {
    }
    return
  }
  func.func @transform_0(%arg0: i32, %arg1: i32, %arg2: i32, %arg3: i32) -> (i32, i32) {
    %c0_i32 = arith.constant 0 : i32
    return %arg0, %arg3 : i32, i32
  }
  func.func @transform_1(%arg0: i32, %arg1: i32, %arg2: i32, %arg3: i32) -> (i32, i32, i32) {
    %c0_i32 = arith.constant 0 : i32
    return %arg2, %arg3, %arg1 : i32, i32, i32
  }
  func.func @transform_2(%arg0: i32, %arg1: i32, %arg2: i32, %arg3: i32) -> (i32, i32, i32) {
    %c0_i32 = arith.constant 0 : i32
    %c0_i32_0 = arith.constant 0 : i32
    return %arg2, %c0_i32, %arg1 : i32, i32, i32
  }
  func.func @transform_3(%arg0: i32, %arg1: i32, %arg2: i32, %arg3: i32) -> (i32, i32, i32) {
    %c0_i32 = arith.constant 0 : i32
    return %arg2, %arg0, %arg1 : i32, i32, i32
  }
}

module attributes {stable_mosaic.version = 11 : i64} {
  func.func @kernel(%arg0: i32, %arg1: i32, %arg2: i32, %arg3: i32, %arg4: memref<1x1x8x32xbf16, #tpu.memory_space<vmem>>, %arg5: memref<1x1x8x32xbf16, #tpu.memory_space<vmem>>, %arg6: memref<1x1x8x32xbf16, #tpu.memory_space<vmem>>, %arg7: memref<1x8x32xbf16, #tpu.memory_space<vmem>>, %arg8: memref<4x8x1xf32, #tpu.memory_space<vmem>>, %arg9: memref<4x8x1xf32, #tpu.memory_space<vmem>>, %arg10: memref<4x8x8xf32, #tpu.memory_space<vmem>>) attributes {dimension_semantics = [#tpu.dimension_semantics<parallel>, #tpu.dimension_semantics<parallel>, #tpu.dimension_semantics<parallel>, #tpu.dimension_semantics<arbitrary>], iteration_bounds = array<i64: 2, 1, 1, 1>, scalar_prefetch = 0 : i64, scratch_operands = 3 : i64, tpu.core_type = #tpu.core_type<tc>, window_params = [{transform_indices = @transform_0, window_bounds = array<i64: 1, 1, 8, 32>}, {transform_indices = @transform_1, window_bounds = array<i64: 1, 1, 8, 32>}, {transform_indices = @transform_2, window_bounds = array<i64: 1, 1, 8, 32>}, {transform_indices = @transform_3, window_bounds = array<i64: 1, 8, 32>}]} {
    %c0_i32 = arith.constant 0 : i32
    %0 = arith.cmpi eq, %arg3, %c0_i32 : i32
    %1 = arith.extui %0 : i1 to i32
    %c0_i32_0 = arith.constant 0 : i32
    %2 = arith.cmpi ne, %1, %c0_i32_0 : i32
    scf.if %2 {
      %cst_131 = arith.constant 0xFF800000 : f32
      %162 = vector.broadcast %cst_131 : f32 to vector<4x8x1xf32>
      %c0_132 = arith.constant 0 : index
      %c0_133 = arith.constant 0 : index
      %c0_134 = arith.constant 0 : index
      %163 = vector.load %arg8[%c0_132, %c0_133, %c0_134] : memref<4x8x1xf32, #tpu.memory_space<vmem>>, vector<4x8x1xf32>
      tpu.vector_store %arg8[%c0_132, %c0_133, %c0_134], %162 {strides = array<i32>} : memref<4x8x1xf32, #tpu.memory_space<vmem>>, vector<4x8x1xf32>,
      %cst_135 = arith.constant 0.000000e+00 : f32
      %164 = vector.broadcast %cst_135 : f32 to vector<4x8x1xf32>
      %c0_136 = arith.constant 0 : index
      %c0_137 = arith.constant 0 : index
      %c0_138 = arith.constant 0 : index
      %165 = vector.load %arg9[%c0_136, %c0_137, %c0_138] : memref<4x8x1xf32, #tpu.memory_space<vmem>>, vector<4x8x1xf32>
      tpu.vector_store %arg9[%c0_136, %c0_137, %c0_138], %164 {strides = array<i32>} : memref<4x8x1xf32, #tpu.memory_space<vmem>>, vector<4x8x1xf32>,
      %cst_139 = arith.constant 0.000000e+00 : f32
      %166 = vector.broadcast %cst_139 : f32 to vector<4x8x8xf32>
      %c0_140 = arith.constant 0 : index
      %c0_141 = arith.constant 0 : index
      %c0_142 = arith.constant 0 : index
      %167 = vector.load %arg10[%c0_140, %c0_141, %c0_142] : memref<4x8x8xf32, #tpu.memory_space<vmem>>, vector<4x8x8xf32>
      tpu.vector_store %arg10[%c0_140, %c0_141, %c0_142], %166 {strides = array<i32>} : memref<4x8x8xf32, #tpu.memory_space<vmem>>, vector<4x8x8xf32>,
    } else {
    }
    %c0 = arith.constant 0 : index
    %c0_1 = arith.constant 0 : index
    %c0_2 = arith.constant 0 : index
    %c0_3 = arith.constant 0 : index
    %3 = vector.load %arg4[%c0, %c0_1, %c0_2, %c0_3] : memref<1x1x8x32xbf16, #tpu.memory_space<vmem>>, vector<1x1x8x8xbf16>
    %4 = vector.shape_cast %3 : vector<1x1x8x8xbf16> to vector<8x8xbf16>
    %c0_4 = arith.constant 0 : index
    %c0_5 = arith.constant 0 : index
    %c0_6 = arith.constant 0 : index
    %c0_7 = arith.constant 0 : index
    %5 = vector.load %arg5[%c0_4, %c0_5, %c0_6, %c0_7] : memref<1x1x8x32xbf16, #tpu.memory_space<vmem>>, vector<1x1x8x8xbf16>
    %6 = vector.shape_cast %5 : vector<1x1x8x8xbf16> to vector<8x8xbf16>
    %c0_8 = arith.constant 0 : index
    %c0_9 = arith.constant 0 : index
    %c0_10 = arith.constant 0 : index
    %c0_11 = arith.constant 0 : index
    %7 = vector.load %arg6[%c0_8, %c0_9, %c0_10, %c0_11] : memref<1x1x8x32xbf16, #tpu.memory_space<vmem>>, vector<1x1x8x8xbf16>
    %8 = vector.shape_cast %7 : vector<1x1x8x8xbf16> to vector<8x8xbf16>
    %cst = arith.constant dense<0.000000e+00> : vector<8x8xf32>
    %9 = tpu.matmul %4, %6, %cst {dimension_numbers = #tpu.dot_dimension_numbers<[1], [1], [0], [0], [0, 0, 1, 0], [], []>} : vector<8x8xbf16>, vector<8x8xbf16>, vector<8x8xf32> -> vector<8x8xf32>
    %c0_12 = arith.constant 0 : index
    %c0_13 = arith.constant 0 : index
    %c0_14 = arith.constant 0 : index
    %10 = vector.load %arg8[%c0_12, %c0_13, %c0_14] : memref<4x8x1xf32, #tpu.memory_space<vmem>>, vector<1x8x1xf32>
    %11 = vector.shape_cast %10 : vector<1x8x1xf32> to vector<8x1xf32>
    %cst_15 = arith.constant dense<0xFF800000> : vector<8xf32>
    %12 = vector.multi_reduction <maximumf>, %9, %cst_15 [1] : vector<8x8xf32> to vector<8xf32>
    %13 = vector.shape_cast %12 : vector<8xf32> to vector<8x1xf32>
    %14 = arith.maximumf %11, %13 : vector<8x1xf32>
    %15 = arith.subf %11, %14 : vector<8x1xf32>
    %16 = math.exp %15 : vector<8x1xf32>
    %17 = vector.broadcast %14 : vector<8x1xf32> to vector<8x8xf32>
    %18 = arith.subf %9, %17 : vector<8x8xf32>
    %19 = math.exp %18 : vector<8x8xf32>
    %c0_16 = arith.constant 0 : index
    %c0_17 = arith.constant 0 : index
    %c0_18 = arith.constant 0 : index
    %20 = vector.load %arg9[%c0_16, %c0_17, %c0_18] : memref<4x8x1xf32, #tpu.memory_space<vmem>>, vector<1x8x1xf32>
    %21 = vector.shape_cast %20 : vector<1x8x1xf32> to vector<8x1xf32>
    %22 = arith.mulf %16, %21 : vector<8x1xf32>
    %cst_19 = arith.constant dense<0.000000e+00> : vector<8xf32>
    %23 = vector.multi_reduction <add>, %19, %cst_19 [1] : vector<8x8xf32> to vector<8xf32>
    %24 = vector.shape_cast %23 : vector<8xf32> to vector<8x1xf32>
    %25 = arith.addf %22, %24 : vector<8x1xf32>
    %c0_20 = arith.constant 0 : index
    %c0_21 = arith.constant 0 : index
    %c0_22 = arith.constant 0 : index
    %26 = vector.load %arg9[%c0_20, %c0_21, %c0_22] : memref<4x8x1xf32, #tpu.memory_space<vmem>>, vector<1x8x1xf32>
    %27 = vector.shape_cast %26 : vector<1x8x1xf32> to vector<8x1xf32>
    %28 = vector.shape_cast %25 : vector<8x1xf32> to vector<1x8x1xf32>
    tpu.vector_store %arg9[%c0_20, %c0_21, %c0_22], %28 {strides = array<i32>} : memref<4x8x1xf32, #tpu.memory_space<vmem>>, vector<1x8x1xf32>,
    %c0_23 = arith.constant 0 : index
    %c0_24 = arith.constant 0 : index
    %c0_25 = arith.constant 0 : index
    %29 = vector.load %arg10[%c0_23, %c0_24, %c0_25] : memref<4x8x8xf32, #tpu.memory_space<vmem>>, vector<1x8x8xf32>
    %30 = vector.shape_cast %29 : vector<1x8x8xf32> to vector<8x8xf32>
    %31 = vector.broadcast %16 : vector<8x1xf32> to vector<8x8xf32>
    %32 = arith.mulf %31, %30 : vector<8x8xf32>
    %33 = arith.truncf %19 : vector<8x8xf32> to vector<8x8xbf16>
    %cst_26 = arith.constant dense<0.000000e+00> : vector<8x8xf32>
    %34 = tpu.matmul %33, %8, %cst_26 {dimension_numbers = #tpu.dot_dimension_numbers<[1], [0], [0], [1], [0, 0, 1, 1], [], []>} : vector<8x8xbf16>, vector<8x8xbf16>, vector<8x8xf32> -> vector<8x8xf32>
    %35 = arith.addf %32, %34 : vector<8x8xf32>
    %c0_27 = arith.constant 0 : index
    %c0_28 = arith.constant 0 : index
    %c0_29 = arith.constant 0 : index
    %36 = vector.load %arg10[%c0_27, %c0_28, %c0_29] : memref<4x8x8xf32, #tpu.memory_space<vmem>>, vector<1x8x8xf32>
    %37 = vector.shape_cast %36 : vector<1x8x8xf32> to vector<8x8xf32>
    %38 = vector.shape_cast %35 : vector<8x8xf32> to vector<1x8x8xf32>
    tpu.vector_store %arg10[%c0_27, %c0_28, %c0_29], %38 {strides = array<i32>} : memref<4x8x8xf32, #tpu.memory_space<vmem>>, vector<1x8x8xf32>,
    %c0_30 = arith.constant 0 : index
    %c0_31 = arith.constant 0 : index
    %c0_32 = arith.constant 0 : index
    %39 = vector.load %arg8[%c0_30, %c0_31, %c0_32] : memref<4x8x1xf32, #tpu.memory_space<vmem>>, vector<1x8x1xf32>
    %40 = vector.shape_cast %39 : vector<1x8x1xf32> to vector<8x1xf32>
    %41 = vector.shape_cast %14 : vector<8x1xf32> to vector<1x8x1xf32>
    tpu.vector_store %arg8[%c0_30, %c0_31, %c0_32], %41 {strides = array<i32>} : memref<4x8x1xf32, #tpu.memory_space<vmem>>, vector<1x8x1xf32>,
    %c0_33 = arith.constant 0 : index
    %c0_34 = arith.constant 0 : index
    %c0_35 = arith.constant 0 : index
    %c8 = arith.constant 8 : index
    %42 = vector.load %arg4[%c0_33, %c0_34, %c0_35, %c8] : memref<1x1x8x32xbf16, #tpu.memory_space<vmem>>, vector<1x1x8x8xbf16>
    %43 = vector.shape_cast %42 : vector<1x1x8x8xbf16> to vector<8x8xbf16>
    %c0_36 = arith.constant 0 : index
    %c0_37 = arith.constant 0 : index
    %c0_38 = arith.constant 0 : index
    %c8_39 = arith.constant 8 : index
    %44 = vector.load %arg5[%c0_36, %c0_37, %c0_38, %c8_39] : memref<1x1x8x32xbf16, #tpu.memory_space<vmem>>, vector<1x1x8x8xbf16>
    %45 = vector.shape_cast %44 : vector<1x1x8x8xbf16> to vector<8x8xbf16>
    %c0_40 = arith.constant 0 : index
    %c0_41 = arith.constant 0 : index
    %c0_42 = arith.constant 0 : index
    %c8_43 = arith.constant 8 : index
    %46 = vector.load %arg6[%c0_40, %c0_41, %c0_42, %c8_43] : memref<1x1x8x32xbf16, #tpu.memory_space<vmem>>, vector<1x1x8x8xbf16>
    %47 = vector.shape_cast %46 : vector<1x1x8x8xbf16> to vector<8x8xbf16>
    %cst_44 = arith.constant dense<0.000000e+00> : vector<8x8xf32>
    %48 = tpu.matmul %43, %45, %cst_44 {dimension_numbers = #tpu.dot_dimension_numbers<[1], [1], [0], [0], [0, 0, 1, 0], [], []>} : vector<8x8xbf16>, vector<8x8xbf16>, vector<8x8xf32> -> vector<8x8xf32>
    %c1 = arith.constant 1 : index
    %c0_45 = arith.constant 0 : index
    %c0_46 = arith.constant 0 : index
    %49 = vector.load %arg8[%c1, %c0_45, %c0_46] : memref<4x8x1xf32, #tpu.memory_space<vmem>>, vector<1x8x1xf32>
    %50 = vector.shape_cast %49 : vector<1x8x1xf32> to vector<8x1xf32>
    %cst_47 = arith.constant dense<0xFF800000> : vector<8xf32>
    %51 = vector.multi_reduction <maximumf>, %48, %cst_47 [1] : vector<8x8xf32> to vector<8xf32>
    %52 = vector.shape_cast %51 : vector<8xf32> to vector<8x1xf32>
    %53 = arith.maximumf %50, %52 : vector<8x1xf32>
    %54 = arith.subf %50, %53 : vector<8x1xf32>
    %55 = math.exp %54 : vector<8x1xf32>
    %56 = vector.broadcast %53 : vector<8x1xf32> to vector<8x8xf32>
    %57 = arith.subf %48, %56 : vector<8x8xf32>
    %58 = math.exp %57 : vector<8x8xf32>
    %c1_48 = arith.constant 1 : index
    %c0_49 = arith.constant 0 : index
    %c0_50 = arith.constant 0 : index
    %59 = vector.load %arg9[%c1_48, %c0_49, %c0_50] : memref<4x8x1xf32, #tpu.memory_space<vmem>>, vector<1x8x1xf32>
    %60 = vector.shape_cast %59 : vector<1x8x1xf32> to vector<8x1xf32>
    %61 = arith.mulf %55, %60 : vector<8x1xf32>
    %cst_51 = arith.constant dense<0.000000e+00> : vector<8xf32>
    %62 = vector.multi_reduction <add>, %58, %cst_51 [1] : vector<8x8xf32> to vector<8xf32>
    %63 = vector.shape_cast %62 : vector<8xf32> to vector<8x1xf32>
    %64 = arith.addf %61, %63 : vector<8x1xf32>
    %c1_52 = arith.constant 1 : index
    %c0_53 = arith.constant 0 : index
    %c0_54 = arith.constant 0 : index
    %65 = vector.load %arg9[%c1_52, %c0_53, %c0_54] : memref<4x8x1xf32, #tpu.memory_space<vmem>>, vector<1x8x1xf32>
    %66 = vector.shape_cast %65 : vector<1x8x1xf32> to vector<8x1xf32>
    %67 = vector.shape_cast %64 : vector<8x1xf32> to vector<1x8x1xf32>
    tpu.vector_store %arg9[%c1_52, %c0_53, %c0_54], %67 {strides = array<i32>} : memref<4x8x1xf32, #tpu.memory_space<vmem>>, vector<1x8x1xf32>,
    %c1_55 = arith.constant 1 : index
    %c0_56 = arith.constant 0 : index
    %c0_57 = arith.constant 0 : index
    %68 = vector.load %arg10[%c1_55, %c0_56, %c0_57] : memref<4x8x8xf32, #tpu.memory_space<vmem>>, vector<1x8x8xf32>
    %69 = vector.shape_cast %68 : vector<1x8x8xf32> to vector<8x8xf32>
    %70 = vector.broadcast %55 : vector<8x1xf32> to vector<8x8xf32>
    %71 = arith.mulf %70, %69 : vector<8x8xf32>
    %72 = arith.truncf %58 : vector<8x8xf32> to vector<8x8xbf16>
    %cst_58 = arith.constant dense<0.000000e+00> : vector<8x8xf32>
    %73 = tpu.matmul %72, %47, %cst_58 {dimension_numbers = #tpu.dot_dimension_numbers<[1], [0], [0], [1], [0, 0, 1, 1], [], []>} : vector<8x8xbf16>, vector<8x8xbf16>, vector<8x8xf32> -> vector<8x8xf32>
    %74 = arith.addf %71, %73 : vector<8x8xf32>
    %c1_59 = arith.constant 1 : index
    %c0_60 = arith.constant 0 : index
    %c0_61 = arith.constant 0 : index
    %75 = vector.load %arg10[%c1_59, %c0_60, %c0_61] : memref<4x8x8xf32, #tpu.memory_space<vmem>>, vector<1x8x8xf32>
    %76 = vector.shape_cast %75 : vector<1x8x8xf32> to vector<8x8xf32>
    %77 = vector.shape_cast %74 : vector<8x8xf32> to vector<1x8x8xf32>
    tpu.vector_store %arg10[%c1_59, %c0_60, %c0_61], %77 {strides = array<i32>} : memref<4x8x8xf32, #tpu.memory_space<vmem>>, vector<1x8x8xf32>,
    %c1_62 = arith.constant 1 : index
    %c0_63 = arith.constant 0 : index
    %c0_64 = arith.constant 0 : index
    %78 = vector.load %arg8[%c1_62, %c0_63, %c0_64] : memref<4x8x1xf32, #tpu.memory_space<vmem>>, vector<1x8x1xf32>
    %79 = vector.shape_cast %78 : vector<1x8x1xf32> to vector<8x1xf32>
    %80 = vector.shape_cast %53 : vector<8x1xf32> to vector<1x8x1xf32>
    tpu.vector_store %arg8[%c1_62, %c0_63, %c0_64], %80 {strides = array<i32>} : memref<4x8x1xf32, #tpu.memory_space<vmem>>, vector<1x8x1xf32>,
    %c0_65 = arith.constant 0 : index
    %c0_66 = arith.constant 0 : index
    %c0_67 = arith.constant 0 : index
    %c16 = arith.constant 16 : index
    %81 = vector.load %arg4[%c0_65, %c0_66, %c0_67, %c16] : memref<1x1x8x32xbf16, #tpu.memory_space<vmem>>, vector<1x1x8x8xbf16>
    %82 = vector.shape_cast %81 : vector<1x1x8x8xbf16> to vector<8x8xbf16>
    %c0_68 = arith.constant 0 : index
    %c0_69 = arith.constant 0 : index
    %c0_70 = arith.constant 0 : index
    %c16_71 = arith.constant 16 : index
    %83 = vector.load %arg5[%c0_68, %c0_69, %c0_70, %c16_71] : memref<1x1x8x32xbf16, #tpu.memory_space<vmem>>, vector<1x1x8x8xbf16>
    %84 = vector.shape_cast %83 : vector<1x1x8x8xbf16> to vector<8x8xbf16>
    %c0_72 = arith.constant 0 : index
    %c0_73 = arith.constant 0 : index
    %c0_74 = arith.constant 0 : index
    %c16_75 = arith.constant 16 : index
    %85 = vector.load %arg6[%c0_72, %c0_73, %c0_74, %c16_75] : memref<1x1x8x32xbf16, #tpu.memory_space<vmem>>, vector<1x1x8x8xbf16>
    %86 = vector.shape_cast %85 : vector<1x1x8x8xbf16> to vector<8x8xbf16>
    %cst_76 = arith.constant dense<0.000000e+00> : vector<8x8xf32>
    %87 = tpu.matmul %82, %84, %cst_76 {dimension_numbers = #tpu.dot_dimension_numbers<[1], [1], [0], [0], [0, 0, 1, 0], [], []>} : vector<8x8xbf16>, vector<8x8xbf16>, vector<8x8xf32> -> vector<8x8xf32>
    %c2 = arith.constant 2 : index
    %c0_77 = arith.constant 0 : index
    %c0_78 = arith.constant 0 : index
    %88 = vector.load %arg8[%c2, %c0_77, %c0_78] : memref<4x8x1xf32, #tpu.memory_space<vmem>>, vector<1x8x1xf32>
    %89 = vector.shape_cast %88 : vector<1x8x1xf32> to vector<8x1xf32>
    %cst_79 = arith.constant dense<0xFF800000> : vector<8xf32>
    %90 = vector.multi_reduction <maximumf>, %87, %cst_79 [1] : vector<8x8xf32> to vector<8xf32>
    %91 = vector.shape_cast %90 : vector<8xf32> to vector<8x1xf32>
    %92 = arith.maximumf %89, %91 : vector<8x1xf32>
    %93 = arith.subf %89, %92 : vector<8x1xf32>
    %94 = math.exp %93 : vector<8x1xf32>
    %95 = vector.broadcast %92 : vector<8x1xf32> to vector<8x8xf32>
    %96 = arith.subf %87, %95 : vector<8x8xf32>
    %97 = math.exp %96 : vector<8x8xf32>
    %c2_80 = arith.constant 2 : index
    %c0_81 = arith.constant 0 : index
    %c0_82 = arith.constant 0 : index
    %98 = vector.load %arg9[%c2_80, %c0_81, %c0_82] : memref<4x8x1xf32, #tpu.memory_space<vmem>>, vector<1x8x1xf32>
    %99 = vector.shape_cast %98 : vector<1x8x1xf32> to vector<8x1xf32>
    %100 = arith.mulf %94, %99 : vector<8x1xf32>
    %cst_83 = arith.constant dense<0.000000e+00> : vector<8xf32>
    %101 = vector.multi_reduction <add>, %97, %cst_83 [1] : vector<8x8xf32> to vector<8xf32>
    %102 = vector.shape_cast %101 : vector<8xf32> to vector<8x1xf32>
    %103 = arith.addf %100, %102 : vector<8x1xf32>
    %c2_84 = arith.constant 2 : index
    %c0_85 = arith.constant 0 : index
    %c0_86 = arith.constant 0 : index
    %104 = vector.load %arg9[%c2_84, %c0_85, %c0_86] : memref<4x8x1xf32, #tpu.memory_space<vmem>>, vector<1x8x1xf32>
    %105 = vector.shape_cast %104 : vector<1x8x1xf32> to vector<8x1xf32>
    %106 = vector.shape_cast %103 : vector<8x1xf32> to vector<1x8x1xf32>
    tpu.vector_store %arg9[%c2_84, %c0_85, %c0_86], %106 {strides = array<i32>} : memref<4x8x1xf32, #tpu.memory_space<vmem>>, vector<1x8x1xf32>,
    %c2_87 = arith.constant 2 : index
    %c0_88 = arith.constant 0 : index
    %c0_89 = arith.constant 0 : index
    %107 = vector.load %arg10[%c2_87, %c0_88, %c0_89] : memref<4x8x8xf32, #tpu.memory_space<vmem>>, vector<1x8x8xf32>
    %108 = vector.shape_cast %107 : vector<1x8x8xf32> to vector<8x8xf32>
    %109 = vector.broadcast %94 : vector<8x1xf32> to vector<8x8xf32>
    %110 = arith.mulf %109, %108 : vector<8x8xf32>
    %111 = arith.truncf %97 : vector<8x8xf32> to vector<8x8xbf16>
    %cst_90 = arith.constant dense<0.000000e+00> : vector<8x8xf32>
    %112 = tpu.matmul %111, %86, %cst_90 {dimension_numbers = #tpu.dot_dimension_numbers<[1], [0], [0], [1], [0, 0, 1, 1], [], []>} : vector<8x8xbf16>, vector<8x8xbf16>, vector<8x8xf32> -> vector<8x8xf32>
    %113 = arith.addf %110, %112 : vector<8x8xf32>
    %c2_91 = arith.constant 2 : index
    %c0_92 = arith.constant 0 : index
    %c0_93 = arith.constant 0 : index
    %114 = vector.load %arg10[%c2_91, %c0_92, %c0_93] : memref<4x8x8xf32, #tpu.memory_space<vmem>>, vector<1x8x8xf32>
    %115 = vector.shape_cast %114 : vector<1x8x8xf32> to vector<8x8xf32>
    %116 = vector.shape_cast %113 : vector<8x8xf32> to vector<1x8x8xf32>
    tpu.vector_store %arg10[%c2_91, %c0_92, %c0_93], %116 {strides = array<i32>} : memref<4x8x8xf32, #tpu.memory_space<vmem>>, vector<1x8x8xf32>,
    %c2_94 = arith.constant 2 : index
    %c0_95 = arith.constant 0 : index
    %c0_96 = arith.constant 0 : index
    %117 = vector.load %arg8[%c2_94, %c0_95, %c0_96] : memref<4x8x1xf32, #tpu.memory_space<vmem>>, vector<1x8x1xf32>
    %118 = vector.shape_cast %117 : vector<1x8x1xf32> to vector<8x1xf32>
    %119 = vector.shape_cast %92 : vector<8x1xf32> to vector<1x8x1xf32>
    tpu.vector_store %arg8[%c2_94, %c0_95, %c0_96], %119 {strides = array<i32>} : memref<4x8x1xf32, #tpu.memory_space<vmem>>, vector<1x8x1xf32>,
    %c0_97 = arith.constant 0 : index
    %c0_98 = arith.constant 0 : index
    %c0_99 = arith.constant 0 : index
    %c24 = arith.constant 24 : index
    %120 = vector.load %arg4[%c0_97, %c0_98, %c0_99, %c24] : memref<1x1x8x32xbf16, #tpu.memory_space<vmem>>, vector<1x1x8x8xbf16>
    %121 = vector.shape_cast %120 : vector<1x1x8x8xbf16> to vector<8x8xbf16>
    %c0_100 = arith.constant 0 : index
    %c0_101 = arith.constant 0 : index
    %c0_102 = arith.constant 0 : index
    %c24_103 = arith.constant 24 : index
    %122 = vector.load %arg5[%c0_100, %c0_101, %c0_102, %c24_103] : memref<1x1x8x32xbf16, #tpu.memory_space<vmem>>, vector<1x1x8x8xbf16>
    %123 = vector.shape_cast %122 : vector<1x1x8x8xbf16> to vector<8x8xbf16>
    %c0_104 = arith.constant 0 : index
    %c0_105 = arith.constant 0 : index
    %c0_106 = arith.constant 0 : index
    %c24_107 = arith.constant 24 : index
    %124 = vector.load %arg6[%c0_104, %c0_105, %c0_106, %c24_107] : memref<1x1x8x32xbf16, #tpu.memory_space<vmem>>, vector<1x1x8x8xbf16>
    %125 = vector.shape_cast %124 : vector<1x1x8x8xbf16> to vector<8x8xbf16>
    %cst_108 = arith.constant dense<0.000000e+00> : vector<8x8xf32>
    %126 = tpu.matmul %121, %123, %cst_108 {dimension_numbers = #tpu.dot_dimension_numbers<[1], [1], [0], [0], [0, 0, 1, 0], [], []>} : vector<8x8xbf16>, vector<8x8xbf16>, vector<8x8xf32> -> vector<8x8xf32>
    %c3 = arith.constant 3 : index
    %c0_109 = arith.constant 0 : index
    %c0_110 = arith.constant 0 : index
    %127 = vector.load %arg8[%c3, %c0_109, %c0_110] : memref<4x8x1xf32, #tpu.memory_space<vmem>>, vector<1x8x1xf32>
    %128 = vector.shape_cast %127 : vector<1x8x1xf32> to vector<8x1xf32>
    %cst_111 = arith.constant dense<0xFF800000> : vector<8xf32>
    %129 = vector.multi_reduction <maximumf>, %126, %cst_111 [1] : vector<8x8xf32> to vector<8xf32>
    %130 = vector.shape_cast %129 : vector<8xf32> to vector<8x1xf32>
    %131 = arith.maximumf %128, %130 : vector<8x1xf32>
    %132 = arith.subf %128, %131 : vector<8x1xf32>
    %133 = math.exp %132 : vector<8x1xf32>
    %134 = vector.broadcast %131 : vector<8x1xf32> to vector<8x8xf32>
    %135 = arith.subf %126, %134 : vector<8x8xf32>
    %136 = math.exp %135 : vector<8x8xf32>
    %c3_112 = arith.constant 3 : index
    %c0_113 = arith.constant 0 : index
    %c0_114 = arith.constant 0 : index
    %137 = vector.load %arg9[%c3_112, %c0_113, %c0_114] : memref<4x8x1xf32, #tpu.memory_space<vmem>>, vector<1x8x1xf32>
    %138 = vector.shape_cast %137 : vector<1x8x1xf32> to vector<8x1xf32>
    %139 = arith.mulf %133, %138 : vector<8x1xf32>
    %cst_115 = arith.constant dense<0.000000e+00> : vector<8xf32>
    %140 = vector.multi_reduction <add>, %136, %cst_115 [1] : vector<8x8xf32> to vector<8xf32>
    %141 = vector.shape_cast %140 : vector<8xf32> to vector<8x1xf32>
    %142 = arith.addf %139, %141 : vector<8x1xf32>
    %c3_116 = arith.constant 3 : index
    %c0_117 = arith.constant 0 : index
    %c0_118 = arith.constant 0 : index
    %143 = vector.load %arg9[%c3_116, %c0_117, %c0_118] : memref<4x8x1xf32, #tpu.memory_space<vmem>>, vector<1x8x1xf32>
    %144 = vector.shape_cast %143 : vector<1x8x1xf32> to vector<8x1xf32>
    %145 = vector.shape_cast %142 : vector<8x1xf32> to vector<1x8x1xf32>
    tpu.vector_store %arg9[%c3_116, %c0_117, %c0_118], %145 {strides = array<i32>} : memref<4x8x1xf32, #tpu.memory_space<vmem>>, vector<1x8x1xf32>,
    %c3_119 = arith.constant 3 : index
    %c0_120 = arith.constant 0 : index
    %c0_121 = arith.constant 0 : index
    %146 = vector.load %arg10[%c3_119, %c0_120, %c0_121] : memref<4x8x8xf32, #tpu.memory_space<vmem>>, vector<1x8x8xf32>
    %147 = vector.shape_cast %146 : vector<1x8x8xf32> to vector<8x8xf32>
    %148 = vector.broadcast %133 : vector<8x1xf32> to vector<8x8xf32>
    %149 = arith.mulf %148, %147 : vector<8x8xf32>
    %150 = arith.truncf %136 : vector<8x8xf32> to vector<8x8xbf16>
    %cst_122 = arith.constant dense<0.000000e+00> : vector<8x8xf32>
    %151 = tpu.matmul %150, %125, %cst_122 {dimension_numbers = #tpu.dot_dimension_numbers<[1], [0], [0], [1], [0, 0, 1, 1], [], []>} : vector<8x8xbf16>, vector<8x8xbf16>, vector<8x8xf32> -> vector<8x8xf32>
    %152 = arith.addf %149, %151 : vector<8x8xf32>
    %c3_123 = arith.constant 3 : index
    %c0_124 = arith.constant 0 : index
    %c0_125 = arith.constant 0 : index
    %153 = vector.load %arg10[%c3_123, %c0_124, %c0_125] : memref<4x8x8xf32, #tpu.memory_space<vmem>>, vector<1x8x8xf32>
    %154 = vector.shape_cast %153 : vector<1x8x8xf32> to vector<8x8xf32>
    %155 = vector.shape_cast %152 : vector<8x8xf32> to vector<1x8x8xf32>
    tpu.vector_store %arg10[%c3_123, %c0_124, %c0_125], %155 {strides = array<i32>} : memref<4x8x8xf32, #tpu.memory_space<vmem>>, vector<1x8x8xf32>,
    %c3_126 = arith.constant 3 : index
    %c0_127 = arith.constant 0 : index
    %c0_128 = arith.constant 0 : index
    %156 = vector.load %arg8[%c3_126, %c0_127, %c0_128] : memref<4x8x1xf32, #tpu.memory_space<vmem>>, vector<1x8x1xf32>
    %157 = vector.shape_cast %156 : vector<1x8x1xf32> to vector<8x1xf32>
    %158 = vector.shape_cast %131 : vector<8x1xf32> to vector<1x8x1xf32>
    tpu.vector_store %arg8[%c3_126, %c0_127, %c0_128], %158 {strides = array<i32>} : memref<4x8x1xf32, #tpu.memory_space<vmem>>, vector<1x8x1xf32>,
    %c0_i32_129 = arith.constant 0 : i32
    %159 = arith.cmpi eq, %arg3, %c0_i32_129 : i32
    %160 = arith.extui %159 : i1 to i32
    %c0_i32_130 = arith.constant 0 : i32
    %161 = arith.cmpi ne, %160, %c0_i32_130 : i32
    scf.if %161 {
      %c0_131 = arith.constant 0 : index
      %c0_132 = arith.constant 0 : index
      %c0_133 = arith.constant 0 : index
      %162 = vector.load %arg10[%c0_131, %c0_132, %c0_133] : memref<4x8x8xf32, #tpu.memory_space<vmem>>, vector<1x8x8xf32>
      %163 = vector.shape_cast %162 : vector<1x8x8xf32> to vector<8x8xf32>
      %c0_134 = arith.constant 0 : index
      %c0_135 = arith.constant 0 : index
      %c0_136 = arith.constant 0 : index
      %164 = vector.load %arg9[%c0_134, %c0_135, %c0_136] : memref<4x8x1xf32, #tpu.memory_space<vmem>>, vector<1x8x1xf32>
      %165 = vector.shape_cast %164 : vector<1x8x1xf32> to vector<8x1xf32>
      %166 = vector.broadcast %165 : vector<8x1xf32> to vector<8x8xf32>
      %167 = arith.divf %163, %166 : vector<8x8xf32>
      %168 = arith.truncf %167 : vector<8x8xf32> to vector<8x8xbf16>
      %c0_137 = arith.constant 0 : index
      %c0_138 = arith.constant 0 : index
      %c0_139 = arith.constant 0 : index
      %169 = vector.load %arg7[%c0_137, %c0_138, %c0_139] : memref<1x8x32xbf16, #tpu.memory_space<vmem>>, vector<1x8x8xbf16>
      %170 = vector.shape_cast %169 : vector<1x8x8xbf16> to vector<8x8xbf16>
      %171 = vector.shape_cast %168 : vector<8x8xbf16> to vector<1x8x8xbf16>
      tpu.vector_store %arg7[%c0_137, %c0_138, %c0_139], %171 {strides = array<i32>} : memref<1x8x32xbf16, #tpu.memory_space<vmem>>, vector<1x8x8xbf16>,
      %c1_140 = arith.constant 1 : index
      %c0_141 = arith.constant 0 : index
      %c0_142 = arith.constant 0 : index
      %172 = vector.load %arg10[%c1_140, %c0_141, %c0_142] : memref<4x8x8xf32, #tpu.memory_space<vmem>>, vector<1x8x8xf32>
      %173 = vector.shape_cast %172 : vector<1x8x8xf32> to vector<8x8xf32>
      %c1_143 = arith.constant 1 : index
      %c0_144 = arith.constant 0 : index
      %c0_145 = arith.constant 0 : index
      %174 = vector.load %arg9[%c1_143, %c0_144, %c0_145] : memref<4x8x1xf32, #tpu.memory_space<vmem>>, vector<1x8x1xf32>
      %175 = vector.shape_cast %174 : vector<1x8x1xf32> to vector<8x1xf32>
      %176 = vector.broadcast %175 : vector<8x1xf32> to vector<8x8xf32>
      %177 = arith.divf %173, %176 : vector<8x8xf32>
      %178 = arith.truncf %177 : vector<8x8xf32> to vector<8x8xbf16>
      %c0_146 = arith.constant 0 : index
      %c0_147 = arith.constant 0 : index
      %c8_148 = arith.constant 8 : index
      %179 = vector.load %arg7[%c0_146, %c0_147, %c8_148] : memref<1x8x32xbf16, #tpu.memory_space<vmem>>, vector<1x8x8xbf16>
      %180 = vector.shape_cast %179 : vector<1x8x8xbf16> to vector<8x8xbf16>
      %181 = vector.shape_cast %178 : vector<8x8xbf16> to vector<1x8x8xbf16>
      tpu.vector_store %arg7[%c0_146, %c0_147, %c8_148], %181 {strides = array<i32>} : memref<1x8x32xbf16, #tpu.memory_space<vmem>>, vector<1x8x8xbf16>,
      %c2_149 = arith.constant 2 : index
      %c0_150 = arith.constant 0 : index
      %c0_151 = arith.constant 0 : index
      %182 = vector.load %arg10[%c2_149, %c0_150, %c0_151] : memref<4x8x8xf32, #tpu.memory_space<vmem>>, vector<1x8x8xf32>
      %183 = vector.shape_cast %182 : vector<1x8x8xf32> to vector<8x8xf32>
      %c2_152 = arith.constant 2 : index
      %c0_153 = arith.constant 0 : index
      %c0_154 = arith.constant 0 : index
      %184 = vector.load %arg9[%c2_152, %c0_153, %c0_154] : memref<4x8x1xf32, #tpu.memory_space<vmem>>, vector<1x8x1xf32>
      %185 = vector.shape_cast %184 : vector<1x8x1xf32> to vector<8x1xf32>
      %186 = vector.broadcast %185 : vector<8x1xf32> to vector<8x8xf32>
      %187 = arith.divf %183, %186 : vector<8x8xf32>
      %188 = arith.truncf %187 : vector<8x8xf32> to vector<8x8xbf16>
      %c0_155 = arith.constant 0 : index
      %c0_156 = arith.constant 0 : index
      %c16_157 = arith.constant 16 : index
      %189 = vector.load %arg7[%c0_155, %c0_156, %c16_157] : memref<1x8x32xbf16, #tpu.memory_space<vmem>>, vector<1x8x8xbf16>
      %190 = vector.shape_cast %189 : vector<1x8x8xbf16> to vector<8x8xbf16>
      %191 = vector.shape_cast %188 : vector<8x8xbf16> to vector<1x8x8xbf16>
      tpu.vector_store %arg7[%c0_155, %c0_156, %c16_157], %191 {strides = array<i32>} : memref<1x8x32xbf16, #tpu.memory_space<vmem>>, vector<1x8x8xbf16>,
      %c3_158 = arith.constant 3 : index
      %c0_159 = arith.constant 0 : index
      %c0_160 = arith.constant 0 : index
      %192 = vector.load %arg10[%c3_158, %c0_159, %c0_160] : memref<4x8x8xf32, #tpu.memory_space<vmem>>, vector<1x8x8xf32>
      %193 = vector.shape_cast %192 : vector<1x8x8xf32> to vector<8x8xf32>
      %c3_161 = arith.constant 3 : index
      %c0_162 = arith.constant 0 : index
      %c0_163 = arith.constant 0 : index
      %194 = vector.load %arg9[%c3_161, %c0_162, %c0_163] : memref<4x8x1xf32, #tpu.memory_space<vmem>>, vector<1x8x1xf32>
      %195 = vector.shape_cast %194 : vector<1x8x1xf32> to vector<8x1xf32>
      %196 = vector.broadcast %195 : vector<8x1xf32> to vector<8x8xf32>
      %197 = arith.divf %193, %196 : vector<8x8xf32>
      %198 = arith.truncf %197 : vector<8x8xf32> to vector<8x8xbf16>
      %c0_164 = arith.constant 0 : index
      %c0_165 = arith.constant 0 : index
      %c24_166 = arith.constant 24 : index
      %199 = vector.load %arg7[%c0_164, %c0_165, %c24_166] : memref<1x8x32xbf16, #tpu.memory_space<vmem>>, vector<1x8x8xbf16>
      %200 = vector.shape_cast %199 : vector<1x8x8xbf16> to vector<8x8xbf16>
      %201 = vector.shape_cast %198 : vector<8x8xbf16> to vector<1x8x8xbf16>
      tpu.vector_store %arg7[%c0_164, %c0_165, %c24_166], %201 {strides = array<i32>} : memref<1x8x32xbf16, #tpu.memory_space<vmem>>, vector<1x8x8xbf16>,
    } else {
    }
    return
  }
  func.func @transform_0(%arg0: i32, %arg1: i32, %arg2: i32, %arg3: i32) -> (i32, i32, i32, i32) {
    %c0_i32 = arith.constant 0 : i32
    %c0_i32_0 = arith.constant 0 : i32
    return %c0_i32, %arg0, %arg2, %arg1 : i32, i32, i32, i32
  }
  func.func @transform_1(%arg0: i32, %arg1: i32, %arg2: i32, %arg3: i32) -> (i32, i32, i32, i32) {
    %c1_i32 = arith.constant 1 : i32
    %c0_i32 = arith.constant 0 : i32
    return %c1_i32, %arg0, %arg3, %arg1 : i32, i32, i32, i32
  }
  func.func @transform_2(%arg0: i32, %arg1: i32, %arg2: i32, %arg3: i32) -> (i32, i32, i32, i32) {
    %c2_i32 = arith.constant 2 : i32
    %c0_i32 = arith.constant 0 : i32
    return %c2_i32, %arg0, %arg3, %arg1 : i32, i32, i32, i32
  }
  func.func @transform_3(%arg0: i32, %arg1: i32, %arg2: i32, %arg3: i32) -> (i32, i32, i32) {
    %c0_i32 = arith.constant 0 : i32
    return %arg0, %arg2, %arg1 : i32, i32, i32
  }
}

</mosaic_0001>

<llo_original>
// kernel: non_causal_self_attention.5
$region0: #{non_causal_self_attention.5}
  #allocation0 [shape = 'u32[]', space=smem, size = 0x4, offset = 0x4, fixed_abs, tag = 'smem constant byte address 0x4 - core index']
  #allocation1 [shape = 'u32[144,128]{1,0:T(1,128)}', space=vmem, size = 0x12000, scoped, tag = 'internal scratch']
  #allocation2 [shape = 'f32[16,32]{1,0:T(8,128)}', space=vmem, size = 0x2000, scoped, tag = 'scratch operand']
  %s0 = inlined_call_operand.vmem [shape: bf16[16,32], index: 0, kind: input, shape index: {}]
  %s1 = inlined_call_operand.vmem [shape: bf16[1,32,32], index: 1, kind: input, shape index: {}]
  %s2 = inlined_call_operand.vmem [shape: f32[1,1,32], index: 2, kind: input, shape index: {}]
  %s3 = inlined_call_operand.hbm [shape: f32[1,16,32], index: 3, kind: output, shape index: {}]
  %s4 = sld [smem:[#allocation0]]
  $region30: #{non_causal_self_attention.5} parent=0
    _
  %s6 = ssub.s32 1, %s4
  %s7 = scalar_select 0, %s6, %s4
  $region1: #{non_causal_self_attention.5} parent=0
    #allocation3 [shape = 'u8[8192]{0}', space=vmem, size = 0x2000, scoped, tag = 'output window, operand 0, single buffered']
    #allocation4 [shape = 's32[1]{0}', space=sflag, size = 0x4, scoped, tag = 'scoped memory for non_causal_self_attention.5']
    %8 = vsyncpa [#allocation4], 0
    // Predicated region
    $region2: #{non_causal_self_attention.5} parent=1 // pred_check
      _
    $region3: #{non_causal_self_attention.5} parent=1 // pred_check_branch
      %10 = sbr.rel (0) target = $region5
    $region4: #{non_causal_self_attention.5} parent=1 // pred_region
      _
    $region5: #{non_causal_self_attention.5} parent=1 // pred_fallthru
      _
    // Predicated region
    $region6: #{non_causal_self_attention.5} parent=1 // pred_check
      _
    $region7: #{non_causal_self_attention.5} parent=1 // pred_check_branch
      %12 = sbr.rel (0) target = $region9
    $region8: #{non_causal_self_attention.5} parent=1 // pred_region
      _
    $region9: #{non_causal_self_attention.5} parent=1 // pred_fallthru
      _
    // Predicated region
    $region10: #{non_causal_self_attention.5} parent=1 // pred_check
      _
    $region11: #{non_causal_self_attention.5} parent=1 // pred_check_branch
      %14 = sbr.rel (0) target = $region13
    $region12: #{non_causal_self_attention.5} parent=1 // pred_region
      _
    $region13: #{non_causal_self_attention.5} parent=1 // pred_fallthru
      _
    %p16 = scmp.eq.s32.totalorder 0, 0
    // Predicated region
    $region14: #{non_causal_self_attention.5} parent=1 // pred_check
      %p17 = pneg %p16
    $region15: #{non_causal_self_attention.5} parent=1 // pred_check_branch
      %19 = sbr.rel (%p17) target = $region17
    $region16: #{non_causal_self_attention.5} parent=1 // pred_region
      %vm20 = vcmask 261120
      %21 = vst.msk [vmem:[#allocation2] sm:$0xff] %vm20, 0.0
      %22 = vst.msk [vmem:[#allocation2 + $0x8] sm:$0xff] %vm20, 0.0
    $region17: #{non_causal_self_attention.5} parent=1 // pred_fallthru
      _
    %v23 = vld [vmem:[#allocation2] sm:$0xff]
    %v24 = vld [vmem:[#allocation2 + $0x8] sm:$0xff]
    %v25 = vld [vmem:[%s0] sm:$0xf]
    %v26 = vld [vmem:[%s0 + $0x4] sm:$0xf]
    %v27 = vld [vmem:[%s1] sm:$0xf]
    %v28 = vld [vmem:[%s1 + $0x4] sm:$0xf]
    %v29 = vld [vmem:[%s1 + $0x8] sm:$0xf]
    %v30 = vld [vmem:[%s1 + $0xc] sm:$0xf]
    %v33 = vunpack.c.l.b16 %v25
    %v34 = vunpack.c.l.b16 %v26
    %v35 = vpack.c.b16 %v34, %v33
    %v40 = vunpack.c.l.b16 %v27
    %v41 = vunpack.c.l.b16 %v28
    %v42 = vunpack.c.l.b16 %v29
    %v43 = vunpack.c.l.b16 %v30
    %v44 = vpack.c.b16 %v41, %v40
    %v45 = vpack.c.b16 %v43, %v42
    %vm48 = vcmask 261120
    %v50 = vsel %vm48, %v35, 0
    %52 = vmatprep.subr.bf16.mxu0 0
    %53 = vmatpush1.bf16.msra.mxu0 %v44
    %54 = vmatprep.subr.bf16.mxu0 0
    %55 = vmatpush1.bf16.msra.mxu0 %v45
    %56 = vmatprep.subr.bf16.mxu0 0
    %57 = vmatpush1.bf16.msra.mxu0 0
    %58 = vmatprep.subr.bf16.mxu0 0
    %59 = vmatpush1.bf16.msra.mxu0 0
    %60 = vmatprep.subr.bf16.mxu0 0
    %61 = vmatpush1.bf16.msra.mxu0 0
    %62 = vmatprep.subr.bf16.mxu0 0
    %63 = vmatpush1.bf16.msra.mxu0 0
    %64 = vmatprep.subr.bf16.mxu0 0
    %65 = vmatpush1.bf16.msra.mxu0 0
    %66 = vmatprep.subr.bf16.mxu0 0
    %67 = vmatpush1.bf16.msra.mxu0 0
    %68 = vmatprep.subr.bf16.mxu0 0
    %69 = vmatpush1.bf16.msra.mxu0 0
    %70 = vmatprep.subr.bf16.mxu0 0
    %71 = vmatpush1.bf16.msra.mxu0 0
    %72 = vmatprep.subr.bf16.mxu0 0
    %73 = vmatpush1.bf16.msra.mxu0 0
    %74 = vmatprep.subr.bf16.mxu0 0
    %75 = vmatpush1.bf16.msra.mxu0 0
    %76 = vmatprep.subr.bf16.mxu0 0
    %77 = vmatpush1.bf16.msra.mxu0 0
    %78 = vmatprep.subr.bf16.mxu0 0
    %79 = vmatpush1.bf16.msra.mxu0 0
    %80 = vmatprep.subr.bf16.mxu0 0
    %81 = vmatpush1.bf16.msra.mxu0 0
    %82 = vmatprep.subr.bf16.mxu0 0
    %83 = vmatpush1.bf16.msra.mxu0 0
    %84 = vmatprep.mubr.bf16.mxu0 0
    %85 = vmatmul.mubr.bf16.gmra.mrb[0].mxu0 %v50
    %v86 = vpop.f32.mrb[0].mxu0
    %v87 = vadd.f32 0.0, %v86
    %v88 = vpop.f32.mrb[0].mxu0
    %v89 = vpop.f32.mrb[0].mxu0
    %v90 = vadd.f32 0.0, %v89
    %v91 = vpop.f32.mrb[0].mxu0
    %92 = vdwg.mxu0
    %v93 = vadd.f32 %v23, %v87
    %v94 = vadd.f32 %v24, %v90
    %95 = vst.msk [vmem:[#allocation2] sm:$0xff] %vm48, %v93
    %96 = vst.msk [vmem:[#allocation2 + $0x8] sm:$0xff] %vm48, %v94
    // Predicated region
    $region18: #{non_causal_self_attention.5} parent=1 // pred_check
      %p97 = pneg %p16
    $region19: #{non_causal_self_attention.5} parent=1 // pred_check_branch
      %99 = sbr.rel (%p97) target = $region21
    $region20: #{non_causal_self_attention.5} parent=1 // pred_region
      %v100 = vld [vmem:[#allocation2] sm:$0xff]
      %v101 = vld [vmem:[#allocation2 + $0x8] sm:$0xff]
      %v102 = vld [vmem:[%s2] sm:$0x1]
      %v104 = vlaneseq
      %v105 = vshrl.u32 %v104, 7
      %v106 = vsub.s32 0, %v105
      %v107 = vrot.slane %v102, %v106
      %v109 = vadd.f32 %v100, %v107
      %v110 = vadd.f32 %v101, %v107
      %111 = vst.msk [vmem:[#allocation3] sm:$0xff] %vm48, %v109
      %112 = vst.msk [vmem:[#allocation3 + $0x8] sm:$0xff] %vm48, %v110
    $region21: #{non_causal_self_attention.5} parent=1 // pred_fallthru
      _
    // Predicated region
    $region22: #{non_causal_self_attention.5} parent=1 // pred_check
      _
    $region23: #{non_causal_self_attention.5} parent=1 // pred_check_branch
      %114 = sbr.rel (0) target = $region25
    $region24: #{non_causal_self_attention.5} parent=1 // pred_region
      %s116 = ssub.s32 256, 256
      %117 = vsyncadd [#allocation4], %s116
      %s118 = sshll.u32 [#allocation3], 4
      %s119 = int_to_ptr.vmem [resolvable:$true] %s118
      %124 = dma.vmem_to_hbm [thread:$0]  %s119, 256, %s3, [#allocation4], 128, 128, 8
    $region25: #{non_causal_self_attention.5} parent=1 // pred_fallthru
      _
    // Predicated region
    $region26: #{non_causal_self_attention.5} parent=1 // pred_check
      _
    $region27: #{non_causal_self_attention.5} parent=1 // pred_check_branch
      %126 = sbr.rel (0) target = $region29
    $region28: #{non_causal_self_attention.5} parent=1 // pred_region
      %127 = dma.done [#allocation4], 256
    $region29: #{non_causal_self_attention.5} parent=1 // pred_fallthru
      _
    %128 = vsyncpa [#allocation4], 1

// kernel: non_causal_self_attention.3
$region0: #{non_causal_self_attention.3}
  #allocation0 [shape = 'u32[]', space=smem, size = 0x4, offset = 0x4, fixed_abs, tag = 'smem constant byte address 0x4 - core index']
  #allocation1 [shape = 'u32[144,128]{1,0:T(1,128)}', space=vmem, size = 0x12000, scoped, tag = 'internal scratch']
  #allocation2 [shape = 'f32[16,32]{1,0:T(8,128)}', space=vmem, size = 0x2000, scoped, tag = 'scratch operand']
  %s0 = inlined_call_operand.vmem [shape: bf16[16,32], index: 0, kind: input, shape index: {}]
  %s1 = inlined_call_operand.vmem [shape: bf16[3,32,32], index: 1, kind: input, shape index: {}]
  %s2 = inlined_call_operand.vmem [shape: f32[3,1,32], index: 2, kind: input, shape index: {}]
  %s3 = inlined_call_operand.vmem [shape: bf16[3,16,32], index: 3, kind: output, shape index: {}]
  %s4 = sld [smem:[#allocation0]]
  $region53: #{non_causal_self_attention.3} parent=0
    _
  %s6 = ssub.s32 1, %s4
  %s7 = scalar_select 0, %s6, %s4
  loop: start=0, step=1, limit=5
  $region2: #{non_causal_self_attention.3} parent=0 // loop_pre_header
    _
  $region3: #{non_causal_self_attention.3} parent=0 // loop_header
    %s9 = sphi 0, %s13
    %p10 = scmp.ge.s32.totalorder %s9, 5
    %s16 = sphi 0, %s42
    %s17 = sphi 0, %s38
    %s18 = sphi 0, %s34
    %s19 = sphi 0, %s30
    %s20 = sphi 0, %s16
    %s21 = sphi 0, %s17
    %s22 = sphi 0, %s18
    %s23 = sphi 0, %s19
    %s24 = sphi 0, %s20
    %s25 = sphi 0, %s21
    %s26 = sphi 0, %s22
    %s27 = sphi 0, %s23
    %s47 = sphi 0, %s49
    %s50 = sphi 0, %s47
    %s51 = sphi 0, %s50
    %s67 = sphi 0, %s51
    %s77 = sphi 0, %s79
    %s80 = sphi 0, %s77
    %s81 = sphi 0, %s80
    %s97 = sphi 0, %s81
    %s105 = sphi 0, %s107
    %s108 = sphi 0, %s105
    %s109 = sphi 0, %s108
    %s125 = sphi 0, %s109
    %s135 = sphi 0, %s137
    %s138 = sphi 0, %s135
    %s139 = sphi 0, %s138
    %s155 = sphi 0, %s139
  $region4: #{non_causal_self_attention.3} parent=0 // loop_header_branch
    %12 = sbr.rel (%p10) target = $region8
  $region5: #{non_causal_self_attention.3} parent=0 // loop_body
    %s14 = ssub.s32 %s9, 1
    %s15 = ssub.s32 %s9, 2
    %s28 = sadd.s32 1, %s19
    %p29 = scmp.ge.s32.totalorder %s28, 1
    %s30 = scalar_select %p29, 0, %s28
    %s31 = sadd.s32 1, %s18
    %s32 = scalar_select %p29, %s31, %s18
    %p33 = scmp.ge.s32.totalorder %s32, 3
    %s34 = scalar_select %p33, 0, %s32
    %s35 = sadd.s32 1, %s17
    %s36 = scalar_select %p33, %s35, %s17
    %p37 = scmp.ge.s32.totalorder %s36, 1
    %s38 = scalar_select %p37, 0, %s36
    %s39 = sadd.s32 1, %s16
    %s40 = scalar_select %p37, %s39, %s16
    %p41 = scmp.ge.s32.totalorder %s40, 1
    %s42 = scalar_select %p41, 0, %s40
    %s43 = ssub.s32 %s16, %s42
    %s44 = ssub.s32 %s19, %s30
    %s45 = sor.u32 %s43, %s44
    %p46 = scmp.eq.s32.totalorder %s45, 0
    %s48 = sadd.s32 %s47, 1
    %s49 = scalar_select %p46, %s47, %s48
    %p52 = pneg %p46
    %p53 = scmp.eq.s32.totalorder %s9, 2
    %p54 = por %p52, %p53
    %p55 = scmp.ne.s32.totalorder %s47, %s50
    %p56 = scmp.eq.s32.totalorder %s9, 0
    %p57 = por %p55, %p56
    %p58 = scmp.ne.s32.totalorder %s47, %s50
    %p59 = scmp.eq.s32.totalorder %s14, 2
    %p60 = por %p58, %p59
    %p61 = scmp.ne.s32.totalorder %s50, %s51
    %p62 = scmp.eq.s32.totalorder %s14, 0
    %p63 = por %p61, %p62
    %p64 = scmp.ne.s32.totalorder %s50, %s51
    %p65 = scmp.eq.s32.totalorder %s15, 2
    %p66 = por %p64, %p65
    %p68 = scmp.ne.s32.totalorder %s51, %s67
    %p69 = scmp.eq.s32.totalorder %s15, 0
    %p70 = por %p68, %p69
    %s71 = ssub.s32 %s18, %s34
    %s72 = ssub.s32 %s19, %s30
    %s73 = sor.u32 %s71, %s72
    %s74 = ssub.s32 %s17, %s38
    %s75 = sor.u32 %s73, %s74
    %p76 = scmp.eq.s32.totalorder %s75, 0
    %s78 = sadd.s32 %s77, 1
    %s79 = scalar_select %p76, %s77, %s78
    %p82 = pneg %p76
    %p83 = scmp.eq.s32.totalorder %s9, 2
    %p84 = por %p82, %p83
    %p85 = scmp.ne.s32.totalorder %s77, %s80
    %p86 = scmp.eq.s32.totalorder %s9, 0
    %p87 = por %p85, %p86
    %p88 = scmp.ne.s32.totalorder %s77, %s80
    %p89 = scmp.eq.s32.totalorder %s14, 2
    %p90 = por %p88, %p89
    %p91 = scmp.ne.s32.totalorder %s80, %s81
    %p92 = scmp.eq.s32.totalorder %s14, 0
    %p93 = por %p91, %p92
    %p94 = scmp.ne.s32.totalorder %s80, %s81
    %p95 = scmp.eq.s32.totalorder %s15, 2
    %p96 = por %p94, %p95
    %p98 = scmp.ne.s32.totalorder %s81, %s97
    %p99 = scmp.eq.s32.totalorder %s15, 0
    %p100 = por %p98, %p99
    %s101 = ssub.s32 %s18, %s34
    %s102 = ssub.s32 %s17, %s38
    %s103 = sor.u32 %s101, %s102
    %p104 = scmp.eq.s32.totalorder %s103, 0
    %s106 = sadd.s32 %s105, 1
    %s107 = scalar_select %p104, %s105, %s106
    %p110 = pneg %p104
    %p111 = scmp.eq.s32.totalorder %s9, 2
    %p112 = por %p110, %p111
    %p113 = scmp.ne.s32.totalorder %s105, %s108
    %p114 = scmp.eq.s32.totalorder %s9, 0
    %p115 = por %p113, %p114
    %p116 = scmp.ne.s32.totalorder %s105, %s108
    %p117 = scmp.eq.s32.totalorder %s14, 2
    %p118 = por %p116, %p117
    %p119 = scmp.ne.s32.totalorder %s108, %s109
    %p120 = scmp.eq.s32.totalorder %s14, 0
    %p121 = por %p119, %p120
    %p122 = scmp.ne.s32.totalorder %s108, %s109
    %p123 = scmp.eq.s32.totalorder %s15, 2
    %p124 = por %p122, %p123
    %p126 = scmp.ne.s32.totalorder %s109, %s125
    %p127 = scmp.eq.s32.totalorder %s15, 0
    %p128 = por %p126, %p127
    %s129 = ssub.s32 %s18, %s34
    %s130 = ssub.s32 %s16, %s42
    %s131 = sor.u32 %s129, %s130
    %s132 = ssub.s32 %s17, %s38
    %s133 = sor.u32 %s131, %s132
    %p134 = scmp.eq.s32.totalorder %s133, 0
    %s136 = sadd.s32 %s135, 1
    %s137 = scalar_select %p134, %s135, %s136
    %p140 = pneg %p134
    %p141 = scmp.eq.s32.totalorder %s9, 2
    %p142 = por %p140, %p141
    %p143 = scmp.ne.s32.totalorder %s135, %s138
    %p144 = scmp.eq.s32.totalorder %s9, 0
    %p145 = por %p143, %p144
    %p146 = scmp.ne.s32.totalorder %s135, %s138
    %p147 = scmp.eq.s32.totalorder %s14, 2
    %p148 = por %p146, %p147
    %p149 = scmp.ne.s32.totalorder %s138, %s139
    %p150 = scmp.eq.s32.totalorder %s14, 0
    %p151 = por %p149, %p150
    %p152 = scmp.ne.s32.totalorder %s138, %s139
    %p153 = scmp.eq.s32.totalorder %s15, 2
    %p154 = por %p152, %p153
    %p156 = scmp.ne.s32.totalorder %s139, %s155
    %p157 = scmp.eq.s32.totalorder %s15, 0
    %p158 = por %p156, %p157
    %p159 = scmp.le.s32.totalorder 1, %s9
    %p160 = scmp.lt.s32.totalorder %s9, 4
    %p161 = pnand %p159, %p160
    %p162 = pneg %p161
    // Predicated region
    $region9: #{non_causal_self_attention.3} parent=5 // pred_check
      _
    $region10: #{non_causal_self_attention.3} parent=5 // pred_check_branch
      %164 = sbr.rel (%p161) target = $region12
    $region11: #{non_causal_self_attention.3} parent=5 // pred_region
      %s165 = ssub.s32 %s9, 1
      // Predicated region
      $region13: #{non_causal_self_attention.3} parent=11 // pred_check
        %p166 = pneg %p63
      $region14: #{non_causal_self_attention.3} parent=11 // pred_check_branch
        %168 = sbr.rel (%p166) target = $region16
      $region15: #{non_causal_self_attention.3} parent=11 // pred_region
        %s169 = smul.u32 2, %s20
        %p170 = scmp.lt.s32.totalorder %s169, 1
        %s171 = scalar_select %p170, %s169, 1
        %p172 = scmp.lt.s32.totalorder %s23, 0
        %s173 = scalar_select %p172, %s23, 0
        %s174 = sadd.s32 %s173, %s171
        %s175 = smul.addr %s174, 4
        %s176 = scalar_lea.vmem %s0, %s175
        %s177 = smul.u32 2, %s20
      $region16: #{non_causal_self_attention.3} parent=11 // pred_fallthru
        _
    $region12: #{non_causal_self_attention.3} parent=5 // pred_fallthru
      _
    %p178 = scmp.lt.s32.totalorder %s9, 3
    // Predicated region
    $region17: #{non_causal_self_attention.3} parent=5 // pred_check
      %p179 = pneg %p178
    $region18: #{non_causal_self_attention.3} parent=5 // pred_check_branch
      %181 = sbr.rel (%p179) target = $region20
    $region19: #{non_causal_self_attention.3} parent=5 // pred_region
      // Predicated region
      $region21: #{non_causal_self_attention.3} parent=19 // pred_check
        %p182 = pneg %p87
      $region22: #{non_causal_self_attention.3} parent=19 // pred_check_branch
        %184 = sbr.rel (%p182) target = $region24
      $region23: #{non_causal_self_attention.3} parent=19 // pred_region
        %s185 = smul.u32 4, %s19
        %p186 = scmp.lt.s32.totalorder %s18, 2
        %s187 = scalar_select %p186, %s18, 2
        %p188 = scmp.lt.s32.totalorder %s185, 3
        %s189 = scalar_select %p188, %s185, 3
        %p190 = scmp.lt.s32.totalorder %s17, 0
        %s191 = scalar_select %p190, %s17, 0
        %s192 = sadd.s32 %s191, %s189
        %s193 = smul.addr %s187, 4
        %s194 = sadd.s32 %s192, %s193
        %s195 = smul.addr %s194, 4
        %s196 = scalar_lea.vmem %s1, %s195
        %s197 = smul.u32 4, %s19
      $region24: #{non_causal_self_attention.3} parent=19 // pred_fallthru
        _
      // Predicated region
      $region25: #{non_causal_self_attention.3} parent=19 // pred_check
        %p198 = pneg %p115
      $region26: #{non_causal_self_attention.3} parent=19 // pred_check_branch
        %200 = sbr.rel (%p198) target = $region28
      $region27: #{non_causal_self_attention.3} parent=19 // pred_region
        %p201 = scmp.lt.s32.totalorder %s18, 2
        %s202 = scalar_select %p201, %s18, 2
        %p203 = scmp.lt.s32.totalorder %s17, 0
        %s204 = scalar_select %p203, %s17, 0
        %s205 = sadd.s32 %s204, %s202
        %s206 = scalar_lea.vmem %s2, %s205
      $region28: #{non_causal_self_attention.3} parent=19 // pred_fallthru
        _
    $region20: #{non_causal_self_attention.3} parent=5 // pred_fallthru
      _
    %p207 = scmp.le.s32.totalorder 1, %s9
    %p208 = scmp.lt.s32.totalorder %s9, 4
    %p209 = pnand %p207, %p208
    %p210 = pneg %p209
    // Predicated region
    $region29: #{non_causal_self_attention.3} parent=5 // pred_check
      _
    $region30: #{non_causal_self_attention.3} parent=5 // pred_check_branch
      %212 = sbr.rel (%p209) target = $region32
    $region31: #{non_causal_self_attention.3} parent=5 // pred_region
      %s213 = ssub.s32 %s9, 1
      %s214 = smul.u32 2, %s20
      %p215 = scmp.lt.s32.totalorder %s214, 1
      %s216 = scalar_select %p215, %s214, 1
      %p217 = scmp.lt.s32.totalorder %s23, 0
      %s218 = scalar_select %p217, %s23, 0
      %s219 = sadd.s32 %s218, %s216
      %s220 = smul.addr %s219, 4
      %s221 = scalar_lea.vmem %s0, %s220
      %p222 = pneg %p63
      %p223 = pneg %p60
      %s224 = smul.u32 4, %s23
      %p225 = scmp.lt.s32.totalorder %s22, 2
      %s226 = scalar_select %p225, %s22, 2
      %p227 = scmp.lt.s32.totalorder %s224, 3
      %s228 = scalar_select %p227, %s224, 3
      %p229 = scmp.lt.s32.totalorder %s21, 0
      %s230 = scalar_select %p229, %s21, 0
      %s231 = sadd.s32 %s230, %s228
      %s232 = smul.addr %s226, 4
      %s233 = sadd.s32 %s231, %s232
      %s234 = smul.addr %s233, 4
      %s235 = scalar_lea.vmem %s1, %s234
      %p236 = pneg %p93
      %p237 = pneg %p90
      %p238 = scmp.lt.s32.totalorder %s22, 2
      %s239 = scalar_select %p238, %s22, 2
      %p240 = scmp.lt.s32.totalorder %s21, 0
      %s241 = scalar_select %p240, %s21, 0
      %s242 = sadd.s32 %s241, %s239
      %s243 = scalar_lea.vmem %s2, %s242
      %p244 = pneg %p121
      %p245 = pneg %p118
      %p246 = pneg %p151
      %p247 = pneg %p148
      %s248 = smul.u32 2, %s20
      %p249 = scmp.lt.s32.totalorder %s22, 2
      %s250 = scalar_select %p249, %s22, 2
      %p251 = scmp.lt.s32.totalorder %s248, 1
      %s252 = scalar_select %p251, %s248, 1
      %p253 = scmp.lt.s32.totalorder %s21, 0
      %s254 = scalar_select %p253, %s21, 0
      %s255 = sadd.s32 %s254, %s252
      %s256 = smul.addr %s250, 2
      %s257 = sadd.s32 %s255, %s256
      %s258 = smul.addr %s257, 4
      %s259 = scalar_lea.vmem %s3, %s258
      %s260 = smul.u32 2, %s20
      %p261 = scmp.lt.s32.totalorder %s260, 1
      %s262 = scalar_select %p261, %s260, 1
      %p263 = scmp.lt.s32.totalorder %s23, 0
      %s264 = scalar_select %p263, %s23, 0
      %s265 = sadd.s32 %s264, %s262
      %s266 = smul.addr %s265, 4
      %s267 = scalar_lea.vmem %s0, %s266
      %s268 = smul.u32 2, %s20
      %s269 = smul.u32 4, %s23
      %p270 = scmp.lt.s32.totalorder %s22, 2
      %s271 = scalar_select %p270, %s22, 2
      %p272 = scmp.lt.s32.totalorder %s269, 3
      %s273 = scalar_select %p272, %s269, 3
      %p274 = scmp.lt.s32.totalorder %s21, 0
      %s275 = scalar_select %p274, %s21, 0
      %s276 = sadd.s32 %s275, %s273
      %s277 = smul.addr %s271, 4
      %s278 = sadd.s32 %s276, %s277
      %s279 = smul.addr %s278, 4
      %s280 = scalar_lea.vmem %s1, %s279
      %s281 = smul.u32 4, %s23
      %p282 = scmp.lt.s32.totalorder %s22, 2
      %s283 = scalar_select %p282, %s22, 2
      %p284 = scmp.lt.s32.totalorder %s21, 0
      %s285 = scalar_select %p284, %s21, 0
      %s286 = sadd.s32 %s285, %s283
      %s287 = scalar_lea.vmem %s2, %s286
      %s288 = smul.u32 2, %s20
      %p289 = scmp.lt.s32.totalorder %s22, 2
      %s290 = scalar_select %p289, %s22, 2
      %p291 = scmp.lt.s32.totalorder %s288, 1
      %s292 = scalar_select %p291, %s288, 1
      %p293 = scmp.lt.s32.totalorder %s21, 0
      %s294 = scalar_select %p293, %s21, 0
      %s295 = sadd.s32 %s294, %s292
      %s296 = smul.addr %s290, 2
      %s297 = sadd.s32 %s295, %s296
      %s298 = smul.addr %s297, 4
      %s299 = scalar_lea.vmem %s3, %s298
      %s300 = smul.u32 2, %s20
      %p302 = scmp.eq.s32.totalorder %s23, 0
      // Predicated region
      $region33: #{non_causal_self_attention.3} parent=31 // pred_check
        %p303 = pneg %p302
      $region34: #{non_causal_self_attention.3} parent=31 // pred_check_branch
        %305 = sbr.rel (%p303) target = $region36
      $region35: #{non_causal_self_attention.3} parent=31 // pred_region
        %vm306 = vcmask 261120
        %307 = vst.msk [vmem:[#allocation2] sm:$0xff] %vm306, 0.0
        %308 = vst.msk [vmem:[#allocation2 + $0x8] sm:$0xff] %vm306, 0.0
      $region36: #{non_causal_self_attention.3} parent=31 // pred_fallthru
        _
      %v309 = vld [vmem:[#allocation2] sm:$0xff]
      %v310 = vld [vmem:[#allocation2 + $0x8] sm:$0xff]
      %v311 = vld [vmem:[%s267] sm:$0xf]
      %v312 = vld [vmem:[%s267 + $0x4] sm:$0xf]
      %v313 = vld [vmem:[%s280] sm:$0xf]
      %v314 = vld [vmem:[%s280 + $0x4] sm:$0xf]
      %v315 = vld [vmem:[%s280 + $0x8] sm:$0xf]
      %v316 = vld [vmem:[%s280 + $0xc] sm:$0xf]
      %v319 = vunpack.c.l.b16 %v311
      %v320 = vunpack.c.l.b16 %v312
      %v321 = vpack.c.b16 %v320, %v319
      %v326 = vunpack.c.l.b16 %v313
      %v327 = vunpack.c.l.b16 %v314
      %v328 = vunpack.c.l.b16 %v315
      %v329 = vunpack.c.l.b16 %v316
      %v330 = vpack.c.b16 %v327, %v326
      %v331 = vpack.c.b16 %v329, %v328
      %vm334 = vcmask 261120
      %v336 = vsel %vm334, %v321, 0
      %338 = vmatprep.subr.bf16.mxu0 0
      %339 = vmatpush1.bf16.msra.mxu0 %v330
      %340 = vmatprep.subr.bf16.mxu0 0
      %341 = vmatpush1.bf16.msra.mxu0 %v331
      %342 = vmatprep.subr.bf16.mxu0 0
      %343 = vmatpush1.bf16.msra.mxu0 0
      %344 = vmatprep.subr.bf16.mxu0 0
      %345 = vmatpush1.bf16.msra.mxu0 0
      %346 = vmatprep.subr.bf16.mxu0 0
      %347 = vmatpush1.bf16.msra.mxu0 0
      %348 = vmatprep.subr.bf16.mxu0 0
      %349 = vmatpush1.bf16.msra.mxu0 0
      %350 = vmatprep.subr.bf16.mxu0 0
      %351 = vmatpush1.bf16.msra.mxu0 0
      %352 = vmatprep.subr.bf16.mxu0 0
      %353 = vmatpush1.bf16.msra.mxu0 0
      %354 = vmatprep.subr.bf16.mxu0 0
      %355 = vmatpush1.bf16.msra.mxu0 0
      %356 = vmatprep.subr.bf16.mxu0 0
      %357 = vmatpush1.bf16.msra.mxu0 0
      %358 = vmatprep.subr.bf16.mxu0 0
      %359 = vmatpush1.bf16.msra.mxu0 0
      %360 = vmatprep.subr.bf16.mxu0 0
      %361 = vmatpush1.bf16.msra.mxu0 0
      %362 = vmatprep.subr.bf16.mxu0 0
      %363 = vmatpush1.bf16.msra.mxu0 0
      %364 = vmatprep.subr.bf16.mxu0 0
      %365 = vmatpush1.bf16.msra.mxu0 0
      %366 = vmatprep.subr.bf16.mxu0 0
      %367 = vmatpush1.bf16.msra.mxu0 0
      %368 = vmatprep.subr.bf16.mxu0 0
      %369 = vmatpush1.bf16.msra.mxu0 0
      %370 = vmatprep.mubr.bf16.mxu0 0
      %371 = vmatmul.mubr.bf16.gmra.mrb[0].mxu0 %v336
      %v372 = vpop.f32.mrb[0].mxu0
      %v373 = vadd.f32 0.0, %v372
      %v374 = vpop.f32.mrb[0].mxu0
      %v375 = vpop.f32.mrb[0].mxu0
      %v376 = vadd.f32 0.0, %v375
      %v377 = vpop.f32.mrb[0].mxu0
      %378 = vdwg.mxu0
      %v379 = vadd.f32 %v309, %v373
      %v380 = vadd.f32 %v310, %v376
      %381 = vst.msk [vmem:[#allocation2] sm:$0xff] %vm334, %v379
      %382 = vst.msk [vmem:[#allocation2 + $0x8] sm:$0xff] %vm334, %v380
      // Predicated region
      $region37: #{non_causal_self_attention.3} parent=31 // pred_check
        %p383 = pneg %p302
      $region38: #{non_causal_self_attention.3} parent=31 // pred_check_branch
        %385 = sbr.rel (%p383) target = $region40
      $region39: #{non_causal_self_attention.3} parent=31 // pred_region
        %v386 = vld [vmem:[#allocation2] sm:$0xff]
        %v387 = vld [vmem:[#allocation2 + $0x8] sm:$0xff]
        %v388 = vld [vmem:[%s287] sm:$0x1]
        %v390 = vlaneseq
        %v391 = vshrl.u32 %v390, 7
        %v392 = vsub.s32 0, %v391
        %v393 = vrot.slane %v388, %v392
        %v395 = vadd.f32 %v386, %v393
        %v396 = vadd.f32 %v387, %v393
        %v397 = vpack.c.bf16 %v396, %v395
        %v399 = vunpack.c.l.b16 %v397
        %v400 = vunpack.c.h.b16 %v397
        %v401 = vpack.c.b16 %v399, %v399
        %v402 = vpack.c.b16 %v400, %v400
        %vm405 = vcmask 257024
        %406 = vst.msk [vmem:[%s299] sm:$0xf] %vm405, %v401
        %407 = vst.msk [vmem:[%s299 + $0x4] sm:$0xf] %vm405, %v402
      $region40: #{non_causal_self_attention.3} parent=31 // pred_fallthru
        _
      %s408 = smul.u32 2, %s20
      %p409 = scmp.lt.s32.totalorder %s22, 2
      %s410 = scalar_select %p409, %s22, 2
      %p411 = scmp.lt.s32.totalorder %s408, 1
      %s412 = scalar_select %p411, %s408, 1
      %p413 = scmp.lt.s32.totalorder %s21, 0
      %s414 = scalar_select %p413, %s21, 0
      %s415 = sadd.s32 %s414, %s412
      %s416 = smul.addr %s410, 2
      %s417 = sadd.s32 %s415, %s416
      %s418 = smul.addr %s417, 4
      %s419 = scalar_lea.vmem %s3, %s418
      // Predicated region
      $region41: #{non_causal_self_attention.3} parent=31 // pred_check
        %p420 = pneg %p148
      $region42: #{non_causal_self_attention.3} parent=31 // pred_check_branch
        %422 = sbr.rel (%p420) target = $region44
      $region43: #{non_causal_self_attention.3} parent=31 // pred_region
        %s423 = smul.u32 2, %s20
      $region44: #{non_causal_self_attention.3} parent=31 // pred_fallthru
        _
    $region32: #{non_causal_self_attention.3} parent=5 // pred_fallthru
      _
    %p424 = scmp.le.s32.totalorder 2, %s9
    // Predicated region
    $region45: #{non_causal_self_attention.3} parent=5 // pred_check
      %p425 = pneg %p424
    $region46: #{non_causal_self_attention.3} parent=5 // pred_check_branch
      %427 = sbr.rel (%p425) target = $region48
    $region47: #{non_causal_self_attention.3} parent=5 // pred_region
      %s428 = ssub.s32 %s9, 2
      // Predicated region
      $region49: #{non_causal_self_attention.3} parent=47 // pred_check
        %p429 = pneg %p154
      $region50: #{non_causal_self_attention.3} parent=47 // pred_check_branch
        %431 = sbr.rel (%p429) target = $region52
      $region51: #{non_causal_self_attention.3} parent=47 // pred_region
        %s432 = smul.u32 2, %s24
        %p433 = scmp.lt.s32.totalorder %s26, 2
        %s434 = scalar_select %p433, %s26, 2
        %p435 = scmp.lt.s32.totalorder %s432, 1
        %s436 = scalar_select %p435, %s432, 1
        %p437 = scmp.lt.s32.totalorder %s25, 0
        %s438 = scalar_select %p437, %s25, 0
        %s439 = sadd.s32 %s438, %s436
        %s440 = smul.addr %s434, 2
        %s441 = sadd.s32 %s439, %s440
        %s442 = smul.addr %s441, 4
        %s443 = scalar_lea.vmem %s3, %s442
      $region52: #{non_causal_self_attention.3} parent=47 // pred_fallthru
        _
    $region48: #{non_causal_self_attention.3} parent=5 // pred_fallthru
      _
  $region6: #{non_causal_self_attention.3} parent=0 // loop_footer
    %s13 = sadd.s32 1, %s9
  $region7: #{non_causal_self_attention.3} parent=0 // loop_footer_branch
    %8 = sbr.rel target = $region3
  $region8: #{non_causal_self_attention.3} parent=0 // loop_exit
    _

// kernel: non_causal_self_attention.4
$region0: #{non_causal_self_attention.4}
  #allocation0 [shape = 'u32[]', space=smem, size = 0x4, offset = 0x4, fixed_abs, tag = 'smem constant byte address 0x4 - core index']
  #allocation1 [shape = 'u32[144,128]{1,0:T(1,128)}', space=vmem, size = 0x12000, scoped, tag = 'internal scratch']
  #allocation2 [shape = 'f32[4,8,1]{2,1,0:T(8,128)}', space=vmem, size = 0x4000, scoped, tag = 'scratch operand']
  #allocation3 [shape = 'f32[4,8,1]{2,1,0:T(8,128)}', space=vmem, size = 0x4000, scoped, tag = 'scratch operand']
  #allocation4 [shape = 'f32[4,8,8]{2,1,0:T(8,128)}', space=vmem, size = 0x4000, scoped, tag = 'scratch operand']
  %s0 = inlined_call_operand.vmem [shape: bf16[3,2,8,32], index: 0, kind: input, shape index: {}, may-alias: {0,1,2}]
  %s1 = inlined_call_operand.vmem [shape: bf16[3,2,8,32], index: 1, kind: input, shape index: {}, may-alias: {0,1,2}]
  %s2 = inlined_call_operand.vmem [shape: bf16[3,2,8,32], index: 2, kind: input, shape index: {}, may-alias: {0,1,2}]
  %s3 = inlined_call_operand.vmem [shape: bf16[2,8,32], index: 3, kind: output, shape index: {}]
  %s4 = sld [smem:[#allocation0]]
  $region53: #{non_causal_self_attention.4} parent=0
    _
  %s6 = ssub.s32 1, %s4
  %s7 = scalar_select 0, %s6, %s4
  loop: start=0, step=1, limit=4
  $region2: #{non_causal_self_attention.4} parent=0 // loop_pre_header
    _
  $region3: #{non_causal_self_attention.4} parent=0 // loop_header
    %s9 = sphi 0, %s13
    %p10 = scmp.ge.s32.totalorder %s9, 4
    %s16 = sphi 0, %s42
    %s17 = sphi 0, %s38
    %s18 = sphi 0, %s34
    %s19 = sphi 0, %s30
    %s20 = sphi 0, %s16
    %s21 = sphi 0, %s17
    %s22 = sphi 0, %s18
    %s23 = sphi 0, %s19
    %s24 = sphi 0, %s20
    %s25 = sphi 0, %s21
    %s26 = sphi 0, %s22
    %s27 = sphi 0, %s23
    %s49 = sphi 0, %s51
    %s52 = sphi 0, %s49
    %s53 = sphi 0, %s52
    %s69 = sphi 0, %s53
    %s79 = sphi 0, %s81
    %s82 = sphi 0, %s79
    %s83 = sphi 0, %s82
    %s99 = sphi 0, %s83
    %s109 = sphi 0, %s111
    %s112 = sphi 0, %s109
    %s113 = sphi 0, %s112
    %s129 = sphi 0, %s113
    %s139 = sphi 0, %s141
    %s142 = sphi 0, %s139
    %s143 = sphi 0, %s142
    %s159 = sphi 0, %s143
  $region4: #{non_causal_self_attention.4} parent=0 // loop_header_branch
    %12 = sbr.rel (%p10) target = $region8
  $region5: #{non_causal_self_attention.4} parent=0 // loop_body
    %s14 = ssub.s32 %s9, 1
    %s15 = ssub.s32 %s9, 2
    %s28 = sadd.s32 1, %s19
    %p29 = scmp.ge.s32.totalorder %s28, 1
    %s30 = scalar_select %p29, 0, %s28
    %s31 = sadd.s32 1, %s18
    %s32 = scalar_select %p29, %s31, %s18
    %p33 = scmp.ge.s32.totalorder %s32, 1
    %s34 = scalar_select %p33, 0, %s32
    %s35 = sadd.s32 1, %s17
    %s36 = scalar_select %p33, %s35, %s17
    %p37 = scmp.ge.s32.totalorder %s36, 1
    %s38 = scalar_select %p37, 0, %s36
    %s39 = sadd.s32 1, %s16
    %s40 = scalar_select %p37, %s39, %s16
    %p41 = scmp.ge.s32.totalorder %s40, 2
    %s42 = scalar_select %p41, 0, %s40
    %s43 = ssub.s32 %s16, %s42
    %s44 = ssub.s32 %s18, %s34
    %s45 = sor.u32 %s43, %s44
    %s46 = ssub.s32 %s17, %s38
    %s47 = sor.u32 %s45, %s46
    %p48 = scmp.eq.s32.totalorder %s47, 0
    %s50 = sadd.s32 %s49, 1
    %s51 = scalar_select %p48, %s49, %s50
    %p54 = pneg %p48
    %p55 = scmp.eq.s32.totalorder %s9, 1
    %p56 = por %p54, %p55
    %p57 = scmp.ne.s32.totalorder %s49, %s52
    %p58 = scmp.eq.s32.totalorder %s9, 0
    %p59 = por %p57, %p58
    %p60 = scmp.ne.s32.totalorder %s49, %s52
    %p61 = scmp.eq.s32.totalorder %s14, 1
    %p62 = por %p60, %p61
    %p63 = scmp.ne.s32.totalorder %s52, %s53
    %p64 = scmp.eq.s32.totalorder %s14, 0
    %p65 = por %p63, %p64
    %p66 = scmp.ne.s32.totalorder %s52, %s53
    %p67 = scmp.eq.s32.totalorder %s15, 1
    %p68 = por %p66, %p67
    %p70 = scmp.ne.s32.totalorder %s53, %s69
    %p71 = scmp.eq.s32.totalorder %s15, 0
    %p72 = por %p70, %p71
    %s73 = ssub.s32 %s16, %s42
    %s74 = ssub.s32 %s19, %s30
    %s75 = sor.u32 %s73, %s74
    %s76 = ssub.s32 %s17, %s38
    %s77 = sor.u32 %s75, %s76
    %p78 = scmp.eq.s32.totalorder %s77, 0
    %s80 = sadd.s32 %s79, 1
    %s81 = scalar_select %p78, %s79, %s80
    %p84 = pneg %p78
    %p85 = scmp.eq.s32.totalorder %s9, 1
    %p86 = por %p84, %p85
    %p87 = scmp.ne.s32.totalorder %s79, %s82
    %p88 = scmp.eq.s32.totalorder %s9, 0
    %p89 = por %p87, %p88
    %p90 = scmp.ne.s32.totalorder %s79, %s82
    %p91 = scmp.eq.s32.totalorder %s14, 1
    %p92 = por %p90, %p91
    %p93 = scmp.ne.s32.totalorder %s82, %s83
    %p94 = scmp.eq.s32.totalorder %s14, 0
    %p95 = por %p93, %p94
    %p96 = scmp.ne.s32.totalorder %s82, %s83
    %p97 = scmp.eq.s32.totalorder %s15, 1
    %p98 = por %p96, %p97
    %p100 = scmp.ne.s32.totalorder %s83, %s99
    %p101 = scmp.eq.s32.totalorder %s15, 0
    %p102 = por %p100, %p101
    %s103 = ssub.s32 %s16, %s42
    %s104 = ssub.s32 %s19, %s30
    %s105 = sor.u32 %s103, %s104
    %s106 = ssub.s32 %s17, %s38
    %s107 = sor.u32 %s105, %s106
    %p108 = scmp.eq.s32.totalorder %s107, 0
    %s110 = sadd.s32 %s109, 1
    %s111 = scalar_select %p108, %s109, %s110
    %p114 = pneg %p108
    %p115 = scmp.eq.s32.totalorder %s9, 1
    %p116 = por %p114, %p115
    %p117 = scmp.ne.s32.totalorder %s109, %s112
    %p118 = scmp.eq.s32.totalorder %s9, 0
    %p119 = por %p117, %p118
    %p120 = scmp.ne.s32.totalorder %s109, %s112
    %p121 = scmp.eq.s32.totalorder %s14, 1
    %p122 = por %p120, %p121
    %p123 = scmp.ne.s32.totalorder %s112, %s113
    %p124 = scmp.eq.s32.totalorder %s14, 0
    %p125 = por %p123, %p124
    %p126 = scmp.ne.s32.totalorder %s112, %s113
    %p127 = scmp.eq.s32.totalorder %s15, 1
    %p128 = por %p126, %p127
    %p130 = scmp.ne.s32.totalorder %s113, %s129
    %p131 = scmp.eq.s32.totalorder %s15, 0
    %p132 = por %p130, %p131
    %s133 = ssub.s32 %s16, %s42
    %s134 = ssub.s32 %s18, %s34
    %s135 = sor.u32 %s133, %s134
    %s136 = ssub.s32 %s17, %s38
    %s137 = sor.u32 %s135, %s136
    %p138 = scmp.eq.s32.totalorder %s137, 0
    %s140 = sadd.s32 %s139, 1
    %s141 = scalar_select %p138, %s139, %s140
    %p144 = pneg %p138
    %p145 = scmp.eq.s32.totalorder %s9, 1
    %p146 = por %p144, %p145
    %p147 = scmp.ne.s32.totalorder %s139, %s142
    %p148 = scmp.eq.s32.totalorder %s9, 0
    %p149 = por %p147, %p148
    %p150 = scmp.ne.s32.totalorder %s139, %s142
    %p151 = scmp.eq.s32.totalorder %s14, 1
    %p152 = por %p150, %p151
    %p153 = scmp.ne.s32.totalorder %s142, %s143
    %p154 = scmp.eq.s32.totalorder %s14, 0
    %p155 = por %p153, %p154
    %p156 = scmp.ne.s32.totalorder %s142, %s143
    %p157 = scmp.eq.s32.totalorder %s15, 1
    %p158 = por %p156, %p157
    %p160 = scmp.ne.s32.totalorder %s143, %s159
    %p161 = scmp.eq.s32.totalorder %s15, 0
    %p162 = por %p160, %p161
    %p163 = scmp.le.s32.totalorder 1, %s9
    %p164 = scmp.lt.s32.totalorder %s9, 3
    %p165 = pnand %p163, %p164
    %p166 = pneg %p165
    // Predicated region
    $region9: #{non_causal_self_attention.4} parent=5 // pred_check
      _
    $region10: #{non_causal_self_attention.4} parent=5 // pred_check_branch
      %168 = sbr.rel (%p165) target = $region12
    $region11: #{non_causal_self_attention.4} parent=5 // pred_region
      %s169 = ssub.s32 %s9, 1
    $region12: #{non_causal_self_attention.4} parent=5 // pred_fallthru
      _
    %p170 = scmp.lt.s32.totalorder %s9, 2
    // Predicated region
    $region13: #{non_causal_self_attention.4} parent=5 // pred_check
      %p171 = pneg %p170
    $region14: #{non_causal_self_attention.4} parent=5 // pred_check_branch
      %173 = sbr.rel (%p171) target = $region16
    $region15: #{non_causal_self_attention.4} parent=5 // pred_region
      // Predicated region
      $region17: #{non_causal_self_attention.4} parent=15 // pred_check
        %p174 = pneg %p59
      $region18: #{non_causal_self_attention.4} parent=15 // pred_check_branch
        %176 = sbr.rel (%p174) target = $region20
      $region19: #{non_causal_self_attention.4} parent=15 // pred_region
        %p177 = scmp.lt.s32.totalorder %s16, 1
        %s178 = scalar_select %p177, %s16, 1
        %p179 = scmp.lt.s32.totalorder %s18, 0
        %s180 = scalar_select %p179, %s18, 0
        %p181 = scmp.lt.s32.totalorder %s17, 0
        %s182 = scalar_select %p181, %s17, 0
        %s183 = sadd.s32 %s182, %s180
        %s184 = sadd.s32 %s183, %s178
        %s185 = smul.addr %s184, 4
        %s186 = scalar_lea.vmem %s0, %s185
      $region20: #{non_causal_self_attention.4} parent=15 // pred_fallthru
        _
      // Predicated region
      $region21: #{non_causal_self_attention.4} parent=15 // pred_check
        %p187 = pneg %p89
      $region22: #{non_causal_self_attention.4} parent=15 // pred_check_branch
        %189 = sbr.rel (%p187) target = $region24
      $region23: #{non_causal_self_attention.4} parent=15 // pred_region
        %p190 = scmp.lt.s32.totalorder %s16, 1
        %s191 = scalar_select %p190, %s16, 1
        %p192 = scmp.lt.s32.totalorder %s19, 0
        %s193 = scalar_select %p192, %s19, 0
        %p194 = scmp.lt.s32.totalorder %s17, 0
        %s195 = scalar_select %p194, %s17, 0
        %s196 = sadd.s32 %s195, %s193
        %s197 = sadd.s32 %s196, %s191
        %s198 = sadd.s32 %s197, 2
        %s199 = smul.addr %s198, 4
        %s200 = scalar_lea.vmem %s1, %s199
      $region24: #{non_causal_self_attention.4} parent=15 // pred_fallthru
        _
      // Predicated region
      $region25: #{non_causal_self_attention.4} parent=15 // pred_check
        %p201 = pneg %p119
      $region26: #{non_causal_self_attention.4} parent=15 // pred_check_branch
        %203 = sbr.rel (%p201) target = $region28
      $region27: #{non_causal_self_attention.4} parent=15 // pred_region
        %p204 = scmp.lt.s32.totalorder %s16, 1
        %s205 = scalar_select %p204, %s16, 1
        %p206 = scmp.lt.s32.totalorder %s19, 0
        %s207 = scalar_select %p206, %s19, 0
        %p208 = scmp.lt.s32.totalorder %s17, 0
        %s209 = scalar_select %p208, %s17, 0
        %s210 = sadd.s32 %s209, %s207
        %s211 = sadd.s32 %s210, %s205
        %s212 = sadd.s32 %s211, 4
        %s213 = smul.addr %s212, 4
        %s214 = scalar_lea.vmem %s2, %s213
      $region28: #{non_causal_self_attention.4} parent=15 // pred_fallthru
        _
    $region16: #{non_causal_self_attention.4} parent=5 // pred_fallthru
      _
    %p215 = scmp.le.s32.totalorder 1, %s9
    %p216 = scmp.lt.s32.totalorder %s9, 3
    %p217 = pnand %p215, %p216
    %p218 = pneg %p217
    // Predicated region
    $region29: #{non_causal_self_attention.4} parent=5 // pred_check
      _
    $region30: #{non_causal_self_attention.4} parent=5 // pred_check_branch
      %220 = sbr.rel (%p217) target = $region32
    $region31: #{non_causal_self_attention.4} parent=5 // pred_region
      %s221 = ssub.s32 %s9, 1
      %p222 = scmp.lt.s32.totalorder %s20, 1
      %s223 = scalar_select %p222, %s20, 1
      %p224 = scmp.lt.s32.totalorder %s22, 0
      %s225 = scalar_select %p224, %s22, 0
      %p226 = scmp.lt.s32.totalorder %s21, 0
      %s227 = scalar_select %p226, %s21, 0
      %s228 = sadd.s32 %s227, %s225
      %s229 = sadd.s32 %s228, %s223
      %s230 = smul.addr %s229, 4
      %s231 = scalar_lea.vmem %s0, %s230
      %p232 = pneg %p65
      %p233 = pneg %p62
      %p234 = scmp.lt.s32.totalorder %s20, 1
      %s235 = scalar_select %p234, %s20, 1
      %p236 = scmp.lt.s32.totalorder %s23, 0
      %s237 = scalar_select %p236, %s23, 0
      %p238 = scmp.lt.s32.totalorder %s21, 0
      %s239 = scalar_select %p238, %s21, 0
      %s240 = sadd.s32 %s239, %s237
      %s241 = sadd.s32 %s240, %s235
      %s242 = sadd.s32 %s241, 2
      %s243 = smul.addr %s242, 4
      %s244 = scalar_lea.vmem %s1, %s243
      %p245 = pneg %p95
      %p246 = pneg %p92
      %p247 = scmp.lt.s32.totalorder %s20, 1
      %s248 = scalar_select %p247, %s20, 1
      %p249 = scmp.lt.s32.totalorder %s23, 0
      %s250 = scalar_select %p249, %s23, 0
      %p251 = scmp.lt.s32.totalorder %s21, 0
      %s252 = scalar_select %p251, %s21, 0
      %s253 = sadd.s32 %s252, %s250
      %s254 = sadd.s32 %s253, %s248
      %s255 = sadd.s32 %s254, 4
      %s256 = smul.addr %s255, 4
      %s257 = scalar_lea.vmem %s2, %s256
      %p258 = pneg %p125
      %p259 = pneg %p122
      %p260 = pneg %p155
      %p261 = pneg %p152
      %p262 = scmp.lt.s32.totalorder %s20, 1
      %s263 = scalar_select %p262, %s20, 1
      %p264 = scmp.lt.s32.totalorder %s22, 0
      %s265 = scalar_select %p264, %s22, 0
      %p266 = scmp.lt.s32.totalorder %s21, 0
      %s267 = scalar_select %p266, %s21, 0
      %s268 = sadd.s32 %s267, %s265
      %s269 = sadd.s32 %s268, %s263
      %s270 = smul.addr %s269, 4
      %s271 = scalar_lea.vmem %s3, %s270
      %p272 = scmp.lt.s32.totalorder %s20, 1
      %s273 = scalar_select %p272, %s20, 1
      %p274 = scmp.lt.s32.totalorder %s22, 0
      %s275 = scalar_select %p274, %s22, 0
      %p276 = scmp.lt.s32.totalorder %s21, 0
      %s277 = scalar_select %p276, %s21, 0
      %s278 = sadd.s32 %s277, %s275
      %s279 = sadd.s32 %s278, %s273
      %s280 = smul.addr %s279, 4
      %s281 = scalar_lea.vmem %s0, %s280
      %p282 = scmp.lt.s32.totalorder %s20, 1
      %s283 = scalar_select %p282, %s20, 1
      %p284 = scmp.lt.s32.totalorder %s23, 0
      %s285 = scalar_select %p284, %s23, 0
      %p286 = scmp.lt.s32.totalorder %s21, 0
      %s287 = scalar_select %p286, %s21, 0
      %s288 = sadd.s32 %s287, %s285
      %s289 = sadd.s32 %s288, %s283
      %s290 = sadd.s32 %s289, 2
      %s291 = smul.addr %s290, 4
      %s292 = scalar_lea.vmem %s1, %s291
      %p293 = scmp.lt.s32.totalorder %s20, 1
      %s294 = scalar_select %p293, %s20, 1
      %p295 = scmp.lt.s32.totalorder %s23, 0
      %s296 = scalar_select %p295, %s23, 0
      %p297 = scmp.lt.s32.totalorder %s21, 0
      %s298 = scalar_select %p297, %s21, 0
      %s299 = sadd.s32 %s298, %s296
      %s300 = sadd.s32 %s299, %s294
      %s301 = sadd.s32 %s300, 4
      %s302 = smul.addr %s301, 4
      %s303 = scalar_lea.vmem %s2, %s302
      %p304 = scmp.lt.s32.totalorder %s20, 1
      %s305 = scalar_select %p304, %s20, 1
      %p306 = scmp.lt.s32.totalorder %s22, 0
      %s307 = scalar_select %p306, %s22, 0
      %p308 = scmp.lt.s32.totalorder %s21, 0
      %s309 = scalar_select %p308, %s21, 0
      %s310 = sadd.s32 %s309, %s307
      %s311 = sadd.s32 %s310, %s305
      %s312 = smul.addr %s311, 4
      %s313 = scalar_lea.vmem %s3, %s312
      %p315 = scmp.eq.s32.totalorder %s23, 0
      // Predicated region
      $region33: #{non_causal_self_attention.4} parent=31 // pred_check
        %p316 = pneg %p315
      $region34: #{non_causal_self_attention.4} parent=31 // pred_check_branch
        %318 = sbr.rel (%p316) target = $region36
      $region35: #{non_causal_self_attention.4} parent=31 // pred_region
        %vm319 = vcmask 7168
        %320 = vst.msk [vmem:[#allocation2] sm:$0xff] %vm319, -inf
        %321 = vst.msk [vmem:[#allocation2 + $0x8] sm:$0xff] %vm319, -inf
        %322 = vst.msk [vmem:[#allocation2 + $0x10] sm:$0xff] %vm319, -inf
        %323 = vst.msk [vmem:[#allocation2 + $0x18] sm:$0xff] %vm319, -inf
        %324 = vst.msk [vmem:[#allocation3] sm:$0xff] %vm319, 0.0
        %325 = vst.msk [vmem:[#allocation3 + $0x8] sm:$0xff] %vm319, 0.0
        %326 = vst.msk [vmem:[#allocation3 + $0x10] sm:$0xff] %vm319, 0.0
        %327 = vst.msk [vmem:[#allocation3 + $0x18] sm:$0xff] %vm319, 0.0
        %vm328 = vcmask 64512
        %329 = vst.msk [vmem:[#allocation4] sm:$0xff] %vm328, 0.0
        %330 = vst.msk [vmem:[#allocation4 + $0x8] sm:$0xff] %vm328, 0.0
        %331 = vst.msk [vmem:[#allocation4 + $0x10] sm:$0xff] %vm328, 0.0
        %332 = vst.msk [vmem:[#allocation4 + $0x18] sm:$0xff] %vm328, 0.0
      $region36: #{non_causal_self_attention.4} parent=31 // pred_fallthru
        _
      %v333 = vld [vmem:[%s281] sm:$0xf]
      %v334 = vld [vmem:[%s292] sm:$0xf]
      %v335 = vld [vmem:[%s303] sm:$0xf]
      %vm336 = vcmask 64512
      %v338 = vsel %vm336, %v333, 0
      %v341 = vsel %vm336, %v334, 0
      %343 = vmatprep.subr.bf16.mxu0 0
      %344 = vmatpush1.bf16.xpose.msra.mxu0 %v341
      %345 = vmatprep.subr.bf16.mxu0 0
      %346 = vmatpush1.bf16.xpose.msra.mxu0 0
      %347 = vmatprep.subr.bf16.mxu0 0
      %348 = vmatpush1.bf16.xpose.msra.mxu0 0
      %349 = vmatprep.subr.bf16.mxu0 0
      %350 = vmatpush1.bf16.xpose.msra.mxu0 0
      %351 = vmatprep.subr.bf16.mxu0 0
      %352 = vmatpush1.bf16.xpose.msra.mxu0 0
      %353 = vmatprep.subr.bf16.mxu0 0
      %354 = vmatpush1.bf16.xpose.msra.mxu0 0
      %355 = vmatprep.subr.bf16.mxu0 0
      %356 = vmatpush1.bf16.xpose.msra.mxu0 0
      %357 = vmatprep.subr.bf16.mxu0 0
      %358 = vmatpush1.bf16.xpose.msra.mxu0 0
      %359 = vmatprep.subr.bf16.mxu0 0
      %360 = vmatpush1.bf16.xpose.msra.mxu0 0
      %361 = vmatprep.subr.bf16.mxu0 0
      %362 = vmatpush1.bf16.xpose.msra.mxu0 0
      %363 = vmatprep.subr.bf16.mxu0 0
      %364 = vmatpush1.bf16.xpose.msra.mxu0 0
      %365 = vmatprep.subr.bf16.mxu0 0
      %366 = vmatpush1.bf16.xpose.msra.mxu0 0
      %367 = vmatprep.subr.bf16.mxu0 0
      %368 = vmatpush1.bf16.xpose.msra.mxu0 0
      %369 = vmatprep.subr.bf16.mxu0 0
      %370 = vmatpush1.bf16.xpose.msra.mxu0 0
      %371 = vmatprep.subr.bf16.mxu0 0
      %372 = vmatpush1.bf16.xpose.msra.mxu0 0
      %373 = vmatprep.subr.bf16.mxu0 0
      %374 = vmatpush1.bf16.xpose.msra.mxu0 0
      %375 = vmatprep.mubr.bf16.mxu0 0
      %376 = vmatmul.mubr.bf16.gmra.mrb[0].mxu0 %v338
      %v377 = vpop.f32.mrb[0].mxu0
      %v378 = vadd.f32 0.0, %v377
      %v379 = vpop.f32.mrb[0].mxu0
      %v380 = vpop.f32.mrb[0].mxu0
      %v381 = vpop.f32.mrb[0].mxu0
      %382 = vdwg.mxu0
      %v383 = vld [vmem:[#allocation2] sm:$0xff]
      %v384 = vsel %vm336, %v378, -inf
      %385 = vmax.xlane.f32.xlu0 %v384
      %v386 = vpop.xlane.xlu0 %385
      %v387 = vmax.f32 %v383, %v386
      %v388 = vsub.f32 %v383, %v387
      %v389 = vmul.f32 %v388, 1.442695
      %v390 = vpow.pop %v389
      %392 = vset.pattern.permute.xlu0 0
      %393 = vperm.xlu0 %392, %v387
      %v394 = vpop.permute.xlu0 %393
      %v396 = vsub.f32 %v378, %v394
      %v397 = vmul.f32 %v396, 1.442695
      %v398 = vpow.pop %v397
      %v399 = vld [vmem:[#allocation3] sm:$0xff]
      %v400 = vmul.f32 %v390, %v399
      %v401 = vsel %vm336, %v398, 0.0
      %402 = vadd.xlane.f32.xlu0 %v401
      %v403 = vpop.xlane.xlu0 %402
      %v404 = vadd.f32 %v400, %v403
      %vm405 = vcmask 7168
      %406 = vst.msk [vmem:[#allocation3] sm:$0xff] %vm405, %v404
      %v407 = vld [vmem:[#allocation4] sm:$0xff]
      %409 = vset.pattern.permute.xlu0 0
      %410 = vperm.xlu0 %409, %v390
      %v411 = vpop.permute.xlu0 %410
      %v413 = vmul.f32 %v411, %v407
      %v414 = vpack.c.bf16 %v398, %v398
      %v416 = vsel %vm336, %v414, 0
      %vm418 = vcmask 1043456
      %v420 = vsel %vm418, %v335, 0
      %422 = vmatprep.subr.bf16.mxu0 0
      %423 = vmatpush1.bf16.msra.mxu0 %v420
      %424 = vmatprep.subr.bf16.mxu0 0
      %425 = vmatpush1.bf16.msra.mxu0 0
      %426 = vmatprep.subr.bf16.mxu0 0
      %427 = vmatpush1.bf16.msra.mxu0 0
      %428 = vmatprep.subr.bf16.mxu0 0
      %429 = vmatpush1.bf16.msra.mxu0 0
      %430 = vmatprep.subr.bf16.mxu0 0
      %431 = vmatpush1.bf16.msra.mxu0 0
      %432 = vmatprep.subr.bf16.mxu0 0
      %433 = vmatpush1.bf16.msra.mxu0 0
      %434 = vmatprep.subr.bf16.mxu0 0
      %435 = vmatpush1.bf16.msra.mxu0 0
      %436 = vmatprep.subr.bf16.mxu0 0
      %437 = vmatpush1.bf16.msra.mxu0 0
      %438 = vmatprep.subr.bf16.mxu0 0
      %439 = vmatpush1.bf16.msra.mxu0 0
      %440 = vmatprep.subr.bf16.mxu0 0
      %441 = vmatpush1.bf16.msra.mxu0 0
      %442 = vmatprep.subr.bf16.mxu0 0
      %443 = vmatpush1.bf16.msra.mxu0 0
      %444 = vmatprep.subr.bf16.mxu0 0
      %445 = vmatpush1.bf16.msra.mxu0 0
      %446 = vmatprep.subr.bf16.mxu0 0
      %447 = vmatpush1.bf16.msra.mxu0 0
      %448 = vmatprep.subr.bf16.mxu0 0
      %449 = vmatpush1.bf16.msra.mxu0 0
      %450 = vmatprep.subr.bf16.mxu0 0
      %451 = vmatpush1.bf16.msra.mxu0 0
      %452 = vmatprep.subr.bf16.mxu0 0
      %453 = vmatpush1.bf16.msra.mxu0 0
      %454 = vmatprep.mubr.bf16.mxu0 0
      %455 = vmatmul.mubr.bf16.gmra.mrb[0].mxu0 %v416
      %v456 = vpop.f32.mrb[0].mxu0
      %v457 = vadd.f32 0.0, %v456
      %v458 = vpop.f32.mrb[0].mxu0
      %v459 = vpop.f32.mrb[0].mxu0
      %v460 = vpop.f32.mrb[0].mxu0
      %461 = vdwg.mxu0
      %v462 = vadd.f32 %v413, %v457
      %463 = vst.msk [vmem:[#allocation4] sm:$0xff] %vm336, %v462
      %464 = vst.msk [vmem:[#allocation2] sm:$0xff] %vm405, %v387
      %v465 = vld [vmem:[%s281] sm:$0xf]
      %v466 = vld [vmem:[%s292] sm:$0xf]
      %v467 = vld [vmem:[%s303] sm:$0xf]
      %v469 = vunpack.c.l.b16 %v465
      %v470 = vpack.c.b16 %v469, %v469
      %471 = vrot.lane.b32.xlu0 %v470, 120
      %v472 = vpop.permute.xlu0 %471
      %v474 = vunpack.c.l.b16 %v466
      %v475 = vpack.c.b16 %v474, %v474
      %476 = vrot.lane.b32.xlu0 %v475, 120
      %v477 = vpop.permute.xlu0 %476
      %v479 = vsel %vm336, %v472, 0
      %v482 = vsel %vm336, %v477, 0
      %484 = vmatprep.subr.bf16.mxu0 0
      %485 = vmatpush1.bf16.xpose.msra.mxu0 %v482
      %486 = vmatprep.subr.bf16.mxu0 0
      %487 = vmatpush1.bf16.xpose.msra.mxu0 0
      %488 = vmatprep.subr.bf16.mxu0 0
      %489 = vmatpush1.bf16.xpose.msra.mxu0 0
      %490 = vmatprep.subr.bf16.mxu0 0
      %491 = vmatpush1.bf16.xpose.msra.mxu0 0
      %492 = vmatprep.subr.bf16.mxu0 0
      %493 = vmatpush1.bf16.xpose.msra.mxu0 0
      %494 = vmatprep.subr.bf16.mxu0 0
      %495 = vmatpush1.bf16.xpose.msra.mxu0 0
      %496 = vmatprep.subr.bf16.mxu0 0
      %497 = vmatpush1.bf16.xpose.msra.mxu0 0
      %498 = vmatprep.subr.bf16.mxu0 0
      %499 = vmatpush1.bf16.xpose.msra.mxu0 0
      %500 = vmatprep.subr.bf16.mxu0 0
      %501 = vmatpush1.bf16.xpose.msra.mxu0 0
      %502 = vmatprep.subr.bf16.mxu0 0
      %503 = vmatpush1.bf16.xpose.msra.mxu0 0
      %504 = vmatprep.subr.bf16.mxu0 0
      %505 = vmatpush1.bf16.xpose.msra.mxu0 0
      %506 = vmatprep.subr.bf16.mxu0 0
      %507 = vmatpush1.bf16.xpose.msra.mxu0 0
      %508 = vmatprep.subr.bf16.mxu0 0
      %509 = vmatpush1.bf16.xpose.msra.mxu0 0
      %510 = vmatprep.subr.bf16.mxu0 0
      %511 = vmatpush1.bf16.xpose.msra.mxu0 0
      %512 = vmatprep.subr.bf16.mxu0 0
      %513 = vmatpush1.bf16.xpose.msra.mxu0 0
      %514 = vmatprep.subr.bf16.mxu0 0
      %515 = vmatpush1.bf16.xpose.msra.mxu0 0
      %516 = vmatprep.mubr.bf16.mxu0 0
      %517 = vmatmul.mubr.bf16.gmra.mrb[0].mxu0 %v479
      %v518 = vpop.f32.mrb[0].mxu0
      %v519 = vadd.f32 0.0, %v518
      %v520 = vpop.f32.mrb[0].mxu0
      %v521 = vpop.f32.mrb[0].mxu0
      %v522 = vpop.f32.mrb[0].mxu0
      %523 = vdwg.mxu0
      %s524 = scalar_lea.vmem [#allocation2], 8
      %v525 = vld [vmem:[%s524] sm:$0xff]
      %v526 = vsel %vm336, %v519, -inf
      %527 = vmax.xlane.f32.xlu0 %v526
      %v528 = vpop.xlane.xlu0 %527
      %v529 = vmax.f32 %v525, %v528
      %v530 = vsub.f32 %v525, %v529
      %v531 = vmul.f32 %v530, 1.442695
      %v532 = vpow.pop %v531
      %534 = vset.pattern.permute.xlu0 0
      %535 = vperm.xlu0 %534, %v529
      %v536 = vpop.permute.xlu0 %535
      %v538 = vsub.f32 %v519, %v536
      %v539 = vmul.f32 %v538, 1.442695
      %v540 = vpow.pop %v539
      %s541 = scalar_lea.vmem [#allocation3], 8
      %v542 = vld [vmem:[%s541] sm:$0xff]
      %v543 = vmul.f32 %v532, %v542
      %v544 = vsel %vm336, %v540, 0.0
      %545 = vadd.xlane.f32.xlu0 %v544
      %v546 = vpop.xlane.xlu0 %545
      %v547 = vadd.f32 %v543, %v546
      %548 = vst.msk [vmem:[%s541] sm:$0xff] %vm405, %v547
      %s549 = scalar_lea.vmem [#allocation4], 8
      %v550 = vld [vmem:[%s549] sm:$0xff]
      %552 = vset.pattern.permute.xlu0 0
      %553 = vperm.xlu0 %552, %v532
      %v554 = vpop.permute.xlu0 %553
      %v556 = vmul.f32 %v554, %v550
      %v557 = vpack.c.bf16 %v540, %v540
      %v559 = vunpack.c.l.b16 %v467
      %v560 = vpack.c.b16 %v559, %v559
      %561 = vrot.lane.b32.xlu0 %v560, 120
      %v562 = vpop.permute.xlu0 %561
      %v564 = vsel %vm336, %v557, 0
      %v567 = vsel %vm418, %v562, 0
      %569 = vmatprep.subr.bf16.mxu0 0
      %570 = vmatpush1.bf16.msra.mxu0 %v567
      %571 = vmatprep.subr.bf16.mxu0 0
      %572 = vmatpush1.bf16.msra.mxu0 0
      %573 = vmatprep.subr.bf16.mxu0 0
      %574 = vmatpush1.bf16.msra.mxu0 0
      %575 = vmatprep.subr.bf16.mxu0 0
      %576 = vmatpush1.bf16.msra.mxu0 0
      %577 = vmatprep.subr.bf16.mxu0 0
      %578 = vmatpush1.bf16.msra.mxu0 0
      %579 = vmatprep.subr.bf16.mxu0 0
      %580 = vmatpush1.bf16.msra.mxu0 0
      %581 = vmatprep.subr.bf16.mxu0 0
      %582 = vmatpush1.bf16.msra.mxu0 0
      %583 = vmatprep.subr.bf16.mxu0 0
      %584 = vmatpush1.bf16.msra.mxu0 0
      %585 = vmatprep.subr.bf16.mxu0 0
      %586 = vmatpush1.bf16.msra.mxu0 0
      %587 = vmatprep.subr.bf16.mxu0 0
      %588 = vmatpush1.bf16.msra.mxu0 0
      %589 = vmatprep.subr.bf16.mxu0 0
      %590 = vmatpush1.bf16.msra.mxu0 0
      %591 = vmatprep.subr.bf16.mxu0 0
      %592 = vmatpush1.bf16.msra.mxu0 0
      %593 = vmatprep.subr.bf16.mxu0 0
      %594 = vmatpush1.bf16.msra.mxu0 0
      %595 = vmatprep.subr.bf16.mxu0 0
      %596 = vmatpush1.bf16.msra.mxu0 0
      %597 = vmatprep.subr.bf16.mxu0 0
      %598 = vmatpush1.bf16.msra.mxu0 0
      %599 = vmatprep.subr.bf16.mxu0 0
      %600 = vmatpush1.bf16.msra.mxu0 0
      %601 = vmatprep.mubr.bf16.mxu0 0
      %602 = vmatmul.mubr.bf16.gmra.mrb[0].mxu0 %v564
      %v603 = vpop.f32.mrb[0].mxu0
      %v604 = vadd.f32 0.0, %v603
      %v605 = vpop.f32.mrb[0].mxu0
      %v606 = vpop.f32.mrb[0].mxu0
      %v607 = vpop.f32.mrb[0].mxu0
      %608 = vdwg.mxu0
      %v609 = vadd.f32 %v556, %v604
      %610 = vst.msk [vmem:[%s549] sm:$0xff] %vm336, %v609
      %611 = vst.msk [vmem:[%s524] sm:$0xff] %vm405, %v529
      %v612 = vld [vmem:[%s281] sm:$0xf]
      %v613 = vld [vmem:[%s292] sm:$0xf]
      %v614 = vld [vmem:[%s303] sm:$0xf]
      %v616 = vunpack.c.l.b16 %v612
      %v617 = vpack.c.b16 %v616, %v616
      %618 = vrot.lane.b32.xlu0 %v617, 112
      %v619 = vpop.permute.xlu0 %618
      %v621 = vunpack.c.l.b16 %v613
      %v622 = vpack.c.b16 %v621, %v621
      %623 = vrot.lane.b32.xlu0 %v622, 112
      %v624 = vpop.permute.xlu0 %623
      %v626 = vsel %vm336, %v619, 0
      %v629 = vsel %vm336, %v624, 0
      %631 = vmatprep.subr.bf16.mxu0 0
      %632 = vmatpush1.bf16.xpose.msra.mxu0 %v629
      %633 = vmatprep.subr.bf16.mxu0 0
      %634 = vmatpush1.bf16.xpose.msra.mxu0 0
      %635 = vmatprep.subr.bf16.mxu0 0
      %636 = vmatpush1.bf16.xpose.msra.mxu0 0
      %637 = vmatprep.subr.bf16.mxu0 0
      %638 = vmatpush1.bf16.xpose.msra.mxu0 0
      %639 = vmatprep.subr.bf16.mxu0 0
      %640 = vmatpush1.bf16.xpose.msra.mxu0 0
      %641 = vmatprep.subr.bf16.mxu0 0
      %642 = vmatpush1.bf16.xpose.msra.mxu0 0
      %643 = vmatprep.subr.bf16.mxu0 0
      %644 = vmatpush1.bf16.xpose.msra.mxu0 0
      %645 = vmatprep.subr.bf16.mxu0 0
      %646 = vmatpush1.bf16.xpose.msra.mxu0 0
      %647 = vmatprep.subr.bf16.mxu0 0
      %648 = vmatpush1.bf16.xpose.msra.mxu0 0
      %649 = vmatprep.subr.bf16.mxu0 0
      %650 = vmatpush1.bf16.xpose.msra.mxu0 0
      %651 = vmatprep.subr.bf16.mxu0 0
      %652 = vmatpush1.bf16.xpose.msra.mxu0 0
      %653 = vmatprep.subr.bf16.mxu0 0
      %654 = vmatpush1.bf16.xpose.msra.mxu0 0
      %655 = vmatprep.subr.bf16.mxu0 0
      %656 = vmatpush1.bf16.xpose.msra.mxu0 0
      %657 = vmatprep.subr.bf16.mxu0 0
      %658 = vmatpush1.bf16.xpose.msra.mxu0 0
      %659 = vmatprep.subr.bf16.mxu0 0
      %660 = vmatpush1.bf16.xpose.msra.mxu0 0
      %661 = vmatprep.subr.bf16.mxu0 0
      %662 = vmatpush1.bf16.xpose.msra.mxu0 0
      %663 = vmatprep.mubr.bf16.mxu0 0
      %664 = vmatmul.mubr.bf16.gmra.mrb[0].mxu0 %v626
      %v665 = vpop.f32.mrb[0].mxu0
      %v666 = vadd.f32 0.0, %v665
      %v667 = vpop.f32.mrb[0].mxu0
      %v668 = vpop.f32.mrb[0].mxu0
      %v669 = vpop.f32.mrb[0].mxu0
      %670 = vdwg.mxu0
      %s671 = scalar_lea.vmem [#allocation2], 16
      %v672 = vld [vmem:[%s671] sm:$0xff]
      %v673 = vsel %vm336, %v666, -inf
      %674 = vmax.xlane.f32.xlu0 %v673
      %v675 = vpop.xlane.xlu0 %674
      %v676 = vmax.f32 %v672, %v675
      %v677 = vsub.f32 %v672, %v676
      %v678 = vmul.f32 %v677, 1.442695
      %v679 = vpow.pop %v678
      %681 = vset.pattern.permute.xlu0 0
      %682 = vperm.xlu0 %681, %v676
      %v683 = vpop.permute.xlu0 %682
      %v685 = vsub.f32 %v666, %v683
      %v686 = vmul.f32 %v685, 1.442695
      %v687 = vpow.pop %v686
      %s688 = scalar_lea.vmem [#allocation3], 16
      %v689 = vld [vmem:[%s688] sm:$0xff]
      %v690 = vmul.f32 %v679, %v689
      %v691 = vsel %vm336, %v687, 0.0
      %692 = vadd.xlane.f32.xlu0 %v691
      %v693 = vpop.xlane.xlu0 %692
      %v694 = vadd.f32 %v690, %v693
      %695 = vst.msk [vmem:[%s688] sm:$0xff] %vm405, %v694
      %s696 = scalar_lea.vmem [#allocation4], 16
      %v697 = vld [vmem:[%s696] sm:$0xff]
      %699 = vset.pattern.permute.xlu0 0
      %700 = vperm.xlu0 %699, %v679
      %v701 = vpop.permute.xlu0 %700
      %v703 = vmul.f32 %v701, %v697
      %v704 = vpack.c.bf16 %v687, %v687
      %v706 = vunpack.c.l.b16 %v614
      %v707 = vpack.c.b16 %v706, %v706
      %708 = vrot.lane.b32.xlu0 %v707, 112
      %v709 = vpop.permute.xlu0 %708
      %v711 = vsel %vm336, %v704, 0
      %v714 = vsel %vm418, %v709, 0
      %716 = vmatprep.subr.bf16.mxu0 0
      %717 = vmatpush1.bf16.msra.mxu0 %v714
      %718 = vmatprep.subr.bf16.mxu0 0
      %719 = vmatpush1.bf16.msra.mxu0 0
      %720 = vmatprep.subr.bf16.mxu0 0
      %721 = vmatpush1.bf16.msra.mxu0 0
      %722 = vmatprep.subr.bf16.mxu0 0
      %723 = vmatpush1.bf16.msra.mxu0 0
      %724 = vmatprep.subr.bf16.mxu0 0
      %725 = vmatpush1.bf16.msra.mxu0 0
      %726 = vmatprep.subr.bf16.mxu0 0
      %727 = vmatpush1.bf16.msra.mxu0 0
      %728 = vmatprep.subr.bf16.mxu0 0
      %729 = vmatpush1.bf16.msra.mxu0 0
      %730 = vmatprep.subr.bf16.mxu0 0
      %731 = vmatpush1.bf16.msra.mxu0 0
      %732 = vmatprep.subr.bf16.mxu0 0
      %733 = vmatpush1.bf16.msra.mxu0 0
      %734 = vmatprep.subr.bf16.mxu0 0
      %735 = vmatpush1.bf16.msra.mxu0 0
      %736 = vmatprep.subr.bf16.mxu0 0
      %737 = vmatpush1.bf16.msra.mxu0 0
      %738 = vmatprep.subr.bf16.mxu0 0
      %739 = vmatpush1.bf16.msra.mxu0 0
      %740 = vmatprep.subr.bf16.mxu0 0
      %741 = vmatpush1.bf16.msra.mxu0 0
      %742 = vmatprep.subr.bf16.mxu0 0
      %743 = vmatpush1.bf16.msra.mxu0 0
      %744 = vmatprep.subr.bf16.mxu0 0
      %745 = vmatpush1.bf16.msra.mxu0 0
      %746 = vmatprep.subr.bf16.mxu0 0
      %747 = vmatpush1.bf16.msra.mxu0 0
      %748 = vmatprep.mubr.bf16.mxu0 0
      %749 = vmatmul.mubr.bf16.gmra.mrb[0].mxu0 %v711
      %v750 = vpop.f32.mrb[0].mxu0
      %v751 = vadd.f32 0.0, %v750
      %v752 = vpop.f32.mrb[0].mxu0
      %v753 = vpop.f32.mrb[0].mxu0
      %v754 = vpop.f32.mrb[0].mxu0
      %755 = vdwg.mxu0
      %v756 = vadd.f32 %v703, %v751
      %757 = vst.msk [vmem:[%s696] sm:$0xff] %vm336, %v756
      %758 = vst.msk [vmem:[%s671] sm:$0xff] %vm405, %v676
      %v759 = vld [vmem:[%s281] sm:$0xf]
      %v760 = vld [vmem:[%s292] sm:$0xf]
      %v761 = vld [vmem:[%s303] sm:$0xf]
      %v763 = vunpack.c.l.b16 %v759
      %v764 = vpack.c.b16 %v763, %v763
      %765 = vrot.lane.b32.xlu0 %v764, 104
      %v766 = vpop.permute.xlu0 %765
      %v768 = vunpack.c.l.b16 %v760
      %v769 = vpack.c.b16 %v768, %v768
      %770 = vrot.lane.b32.xlu0 %v769, 104
      %v771 = vpop.permute.xlu0 %770
      %v773 = vsel %vm336, %v766, 0
      %v776 = vsel %vm336, %v771, 0
      %778 = vmatprep.subr.bf16.mxu0 0
      %779 = vmatpush1.bf16.xpose.msra.mxu0 %v776
      %780 = vmatprep.subr.bf16.mxu0 0
      %781 = vmatpush1.bf16.xpose.msra.mxu0 0
      %782 = vmatprep.subr.bf16.mxu0 0
      %783 = vmatpush1.bf16.xpose.msra.mxu0 0
      %784 = vmatprep.subr.bf16.mxu0 0
      %785 = vmatpush1.bf16.xpose.msra.mxu0 0
      %786 = vmatprep.subr.bf16.mxu0 0
      %787 = vmatpush1.bf16.xpose.msra.mxu0 0
      %788 = vmatprep.subr.bf16.mxu0 0
      %789 = vmatpush1.bf16.xpose.msra.mxu0 0
      %790 = vmatprep.subr.bf16.mxu0 0
      %791 = vmatpush1.bf16.xpose.msra.mxu0 0
      %792 = vmatprep.subr.bf16.mxu0 0
      %793 = vmatpush1.bf16.xpose.msra.mxu0 0
      %794 = vmatprep.subr.bf16.mxu0 0
      %795 = vmatpush1.bf16.xpose.msra.mxu0 0
      %796 = vmatprep.subr.bf16.mxu0 0
      %797 = vmatpush1.bf16.xpose.msra.mxu0 0
      %798 = vmatprep.subr.bf16.mxu0 0
      %799 = vmatpush1.bf16.xpose.msra.mxu0 0
      %800 = vmatprep.subr.bf16.mxu0 0
      %801 = vmatpush1.bf16.xpose.msra.mxu0 0
      %802 = vmatprep.subr.bf16.mxu0 0
      %803 = vmatpush1.bf16.xpose.msra.mxu0 0
      %804 = vmatprep.subr.bf16.mxu0 0
      %805 = vmatpush1.bf16.xpose.msra.mxu0 0
      %806 = vmatprep.subr.bf16.mxu0 0
      %807 = vmatpush1.bf16.xpose.msra.mxu0 0
      %808 = vmatprep.subr.bf16.mxu0 0
      %809 = vmatpush1.bf16.xpose.msra.mxu0 0
      %810 = vmatprep.mubr.bf16.mxu0 0
      %811 = vmatmul.mubr.bf16.gmra.mrb[0].mxu0 %v773
      %v812 = vpop.f32.mrb[0].mxu0
      %v813 = vadd.f32 0.0, %v812
      %v814 = vpop.f32.mrb[0].mxu0
      %v815 = vpop.f32.mrb[0].mxu0
      %v816 = vpop.f32.mrb[0].mxu0
      %817 = vdwg.mxu0
      %s818 = scalar_lea.vmem [#allocation2], 24
      %v819 = vld [vmem:[%s818] sm:$0xff]
      %v820 = vsel %vm336, %v813, -inf
      %821 = vmax.xlane.f32.xlu0 %v820
      %v822 = vpop.xlane.xlu0 %821
      %v823 = vmax.f32 %v819, %v822
      %v824 = vsub.f32 %v819, %v823
      %v825 = vmul.f32 %v824, 1.442695
      %v826 = vpow.pop %v825
      %828 = vset.pattern.permute.xlu0 0
      %829 = vperm.xlu0 %828, %v823
      %v830 = vpop.permute.xlu0 %829
      %v832 = vsub.f32 %v813, %v830
      %v833 = vmul.f32 %v832, 1.442695
      %v834 = vpow.pop %v833
      %s835 = scalar_lea.vmem [#allocation3], 24
      %v836 = vld [vmem:[%s835] sm:$0xff]
      %v837 = vmul.f32 %v826, %v836
      %v838 = vsel %vm336, %v834, 0.0
      %839 = vadd.xlane.f32.xlu0 %v838
      %v840 = vpop.xlane.xlu0 %839
      %v841 = vadd.f32 %v837, %v840
      %842 = vst.msk [vmem:[%s835] sm:$0xff] %vm405, %v841
      %s843 = scalar_lea.vmem [#allocation4], 24
      %v844 = vld [vmem:[%s843] sm:$0xff]
      %846 = vset.pattern.permute.xlu0 0
      %847 = vperm.xlu0 %846, %v826
      %v848 = vpop.permute.xlu0 %847
      %v850 = vmul.f32 %v848, %v844
      %v851 = vpack.c.bf16 %v834, %v834
      %v853 = vunpack.c.l.b16 %v761
      %v854 = vpack.c.b16 %v853, %v853
      %855 = vrot.lane.b32.xlu0 %v854, 104
      %v856 = vpop.permute.xlu0 %855
      %v858 = vsel %vm336, %v851, 0
      %v861 = vsel %vm418, %v856, 0
      %863 = vmatprep.subr.bf16.mxu0 0
      %864 = vmatpush1.bf16.msra.mxu0 %v861
      %865 = vmatprep.subr.bf16.mxu0 0
      %866 = vmatpush1.bf16.msra.mxu0 0
      %867 = vmatprep.subr.bf16.mxu0 0
      %868 = vmatpush1.bf16.msra.mxu0 0
      %869 = vmatprep.subr.bf16.mxu0 0
      %870 = vmatpush1.bf16.msra.mxu0 0
      %871 = vmatprep.subr.bf16.mxu0 0
      %872 = vmatpush1.bf16.msra.mxu0 0
      %873 = vmatprep.subr.bf16.mxu0 0
      %874 = vmatpush1.bf16.msra.mxu0 0
      %875 = vmatprep.subr.bf16.mxu0 0
      %876 = vmatpush1.bf16.msra.mxu0 0
      %877 = vmatprep.subr.bf16.mxu0 0
      %878 = vmatpush1.bf16.msra.mxu0 0
      %879 = vmatprep.subr.bf16.mxu0 0
      %880 = vmatpush1.bf16.msra.mxu0 0
      %881 = vmatprep.subr.bf16.mxu0 0
      %882 = vmatpush1.bf16.msra.mxu0 0
      %883 = vmatprep.subr.bf16.mxu0 0
      %884 = vmatpush1.bf16.msra.mxu0 0
      %885 = vmatprep.subr.bf16.mxu0 0
      %886 = vmatpush1.bf16.msra.mxu0 0
      %887 = vmatprep.subr.bf16.mxu0 0
      %888 = vmatpush1.bf16.msra.mxu0 0
      %889 = vmatprep.subr.bf16.mxu0 0
      %890 = vmatpush1.bf16.msra.mxu0 0
      %891 = vmatprep.subr.bf16.mxu0 0
      %892 = vmatpush1.bf16.msra.mxu0 0
      %893 = vmatprep.subr.bf16.mxu0 0
      %894 = vmatpush1.bf16.msra.mxu0 0
      %895 = vmatprep.mubr.bf16.mxu0 0
      %896 = vmatmul.mubr.bf16.gmra.mrb[0].mxu0 %v858
      %v897 = vpop.f32.mrb[0].mxu0
      %v898 = vadd.f32 0.0, %v897
      %v899 = vpop.f32.mrb[0].mxu0
      %v900 = vpop.f32.mrb[0].mxu0
      %v901 = vpop.f32.mrb[0].mxu0
      %902 = vdwg.mxu0
      %v903 = vadd.f32 %v850, %v898
      %904 = vst.msk [vmem:[%s843] sm:$0xff] %vm336, %v903
      %905 = vst.msk [vmem:[%s818] sm:$0xff] %vm405, %v823
      // Predicated region
      $region37: #{non_causal_self_attention.4} parent=31 // pred_check
        %p906 = pneg %p315
      $region38: #{non_causal_self_attention.4} parent=31 // pred_check_branch
        %908 = sbr.rel (%p906) target = $region40
      $region39: #{non_causal_self_attention.4} parent=31 // pred_region
        %v909 = vld [vmem:[#allocation4] sm:$0xff]
        %v910 = vld [vmem:[#allocation3] sm:$0xff]
        %912 = vset.pattern.permute.xlu0 0
        %913 = vperm.xlu0 %912, %v910
        %v914 = vpop.permute.xlu0 %913
        %v916 = vrcp.pop %v914
        %v917 = vmul.f32 %v909, %v916
        %v918 = vpack.c.bf16 %v917, %v917
        %vm919 = vcmask 60416
        %920 = vst.msk [vmem:[%s313] sm:$0xf] %vm919, %v918
        %v921 = vld [vmem:[%s549] sm:$0xff]
        %v922 = vld [vmem:[%s541] sm:$0xff]
        %924 = vset.pattern.permute.xlu0 0
        %925 = vperm.xlu0 %924, %v922
        %v926 = vpop.permute.xlu0 %925
        %v928 = vrcp.pop %v926
        %v929 = vmul.f32 %v921, %v928
        %v930 = vpack.c.bf16 %v929, %v929
        %v932 = vunpack.c.l.b16 %v930
        %v933 = vpack.c.b16 %v932, %v932
        %934 = vrot.lane.b32.xlu0 %v933, 8
        %v935 = vpop.permute.xlu0 %934
        %vm937 = vcmask 126016
        %938 = vst.msk [vmem:[%s313] sm:$0xf] %vm937, %v935
        %v939 = vld [vmem:[%s696] sm:$0xff]
        %v940 = vld [vmem:[%s688] sm:$0xff]
        %942 = vset.pattern.permute.xlu0 0
        %943 = vperm.xlu0 %942, %v940
        %v944 = vpop.permute.xlu0 %943
        %v946 = vrcp.pop %v944
        %v947 = vmul.f32 %v939, %v946
        %v948 = vpack.c.bf16 %v947, %v947
        %v950 = vunpack.c.l.b16 %v948
        %v951 = vpack.c.b16 %v950, %v950
        %952 = vrot.lane.b32.xlu0 %v951, 16
        %v953 = vpop.permute.xlu0 %952
        %vm955 = vcmask 191616
        %956 = vst.msk [vmem:[%s313] sm:$0xf] %vm955, %v953
        %v957 = vld [vmem:[%s843] sm:$0xff]
        %v958 = vld [vmem:[%s835] sm:$0xff]
        %960 = vset.pattern.permute.xlu0 0
        %961 = vperm.xlu0 %960, %v958
        %v962 = vpop.permute.xlu0 %961
        %v964 = vrcp.pop %v962
        %v965 = vmul.f32 %v957, %v964
        %v966 = vpack.c.bf16 %v965, %v965
        %v968 = vunpack.c.l.b16 %v966
        %v969 = vpack.c.b16 %v968, %v968
        %970 = vrot.lane.b32.xlu0 %v969, 24
        %v971 = vpop.permute.xlu0 %970
        %vm973 = vcmask 257216
        %974 = vst.msk [vmem:[%s313] sm:$0xf] %vm973, %v971
      $region40: #{non_causal_self_attention.4} parent=31 // pred_fallthru
        _
      %p975 = scmp.lt.s32.totalorder %s20, 1
      %s976 = scalar_select %p975, %s20, 1
      %p977 = scmp.lt.s32.totalorder %s22, 0
      %s978 = scalar_select %p977, %s22, 0
      %p979 = scmp.lt.s32.totalorder %s21, 0
      %s980 = scalar_select %p979, %s21, 0
      %s981 = sadd.s32 %s980, %s978
      %s982 = sadd.s32 %s981, %s976
      %s983 = smul.addr %s982, 4
      %s984 = scalar_lea.vmem %s3, %s983
      // Predicated region
      $region41: #{non_causal_self_attention.4} parent=31 // pred_check
        %p985 = pneg %p152
      $region42: #{non_causal_self_attention.4} parent=31 // pred_check_branch
        %987 = sbr.rel (%p985) target = $region44
      $region43: #{non_causal_self_attention.4} parent=31 // pred_region
        _
      $region44: #{non_causal_self_attention.4} parent=31 // pred_fallthru
        _
    $region32: #{non_causal_self_attention.4} parent=5 // pred_fallthru
      _
    %p988 = scmp.le.s32.totalorder 2, %s9
    // Predicated region
    $region45: #{non_causal_self_attention.4} parent=5 // pred_check
      %p989 = pneg %p988
    $region46: #{non_causal_self_attention.4} parent=5 // pred_check_branch
      %991 = sbr.rel (%p989) target = $region48
    $region47: #{non_causal_self_attention.4} parent=5 // pred_region
      %s992 = ssub.s32 %s9, 2
      // Predicated region
      $region49: #{non_causal_self_attention.4} parent=47 // pred_check
        %p993 = pneg %p158
      $region50: #{non_causal_self_attention.4} parent=47 // pred_check_branch
        %995 = sbr.rel (%p993) target = $region52
      $region51: #{non_causal_self_attention.4} parent=47 // pred_region
        %p996 = scmp.lt.s32.totalorder %s24, 1
        %s997 = scalar_select %p996, %s24, 1
        %p998 = scmp.lt.s32.totalorder %s26, 0
        %s999 = scalar_select %p998, %s26, 0
        %p1000 = scmp.lt.s32.totalorder %s25, 0
        %s1001 = scalar_select %p1000, %s25, 0
        %s1002 = sadd.s32 %s1001, %s999
        %s1003 = sadd.s32 %s1002, %s997
        %s1004 = smul.addr %s1003, 4
        %s1005 = scalar_lea.vmem %s3, %s1004
      $region52: #{non_causal_self_attention.4} parent=47 // pred_fallthru
        _
    $region48: #{non_causal_self_attention.4} parent=5 // pred_fallthru
      _
  $region6: #{non_causal_self_attention.4} parent=0 // loop_footer
    %s13 = sadd.s32 1, %s9
  $region7: #{non_causal_self_attention.4} parent=0 // loop_footer_branch
    %8 = sbr.rel target = $region3
  $region8: #{non_causal_self_attention.4} parent=0 // loop_exit
    _

</llo_original>
